<compile_context>
chip_gen: v6e
topology: v6e:2x2x1
jax: 0.10.0
libtpu: 0.0.40
codegen_flags: <defaults>
</compile_context>

<pallas_src>
import functools

import jax
import jax.numpy as jnp
from jax import lax
from jax.experimental import pallas as pl
from jax.experimental.pallas import tpu as pltpu


def _lstm_wavefront_kernel(x_ref, wx_ref, wbig_ref, bfull_ref, wlin_ref,
                           blin_ref, out_ref, hn_ref, cn_ref,
                           *, num_layers, seq_len, hidden):
    """Wavefront stacked-LSTM forward + final Linear, fully VMEM/vreg resident.

    x_ref    : (T, H)        layer-0 input, feature axis zero-padded to H (f32)
    wx_ref   : (H, 4*L*H)    layer-0 W_ih^T scattered into gate-grouped columns,
                             i/f/o columns pre-scaled by 0.5 (f32)
    wbig_ref : (L*H, 4*L*H)  fused recurrent + inter-layer input weights,
                             gate-grouped columns, i/f/o pre-scaled (bf16)
    bfull_ref: (1, 4*L*H)    all-layer b_ih+b_hh, gate-grouped, pre-scaled (f32)
    wlin_ref : (1, H)        final linear weight (f32)
    blin_ref : (1, 1)        final linear bias (f32)
    out_ref  : (1, 1)        scalar prediction
    hn_ref   : (L, H)        final hidden state per layer
    cn_ref   : (L, H)        final cell state per layer
    """
    L, T, H = num_layers, seq_len, hidden
    LH = L * H

    # Hoisted (off the serial chain): layer-0 input projection for all T steps,
    # plus every layer's bias, as one f32 MXU matmul into a register value.
    bfull = bfull_ref[...]                                        # (1, 4LH)
    gx = jnp.dot(x_ref[...], wx_ref[...],
                 preferred_element_type=jnp.float32) + bfull      # (T, 4LH)

    wbig = wbig_ref[...]                                          # (LH, 4LH) bf16

    h = jnp.zeros((1, LH), jnp.float32)   # [h_0 | h_1 | ...] per layer
    c = jnp.zeros((1, LH), jnp.float32)

    # Wavefront: step s advances layer l to time (s - l) for every active layer
    # via a single fused MXU matmul (recurrent W_hh blocks on the diagonal,
    # W_ih of layer l on the (l-1, l) block).
    for s in range(T + L - 1):                       # static -> fully unrolled
        gx_row = gx[s:s + 1, :] if s < T else bfull  # static sublane select
        gates = gx_row + jnp.dot(h.astype(jnp.bfloat16), wbig,
                                 preferred_element_type=jnp.float32)  # (1, 4LH)

        # Single full-width tanh; sigmoid recovered on the VPU because the
        # i/f/o columns were pre-scaled by 0.5 at pack time.
        th = jnp.tanh(gates)
        i = 0.5 * th[:, 0 * LH:1 * LH] + 0.5
        f = 0.5 * th[:, 1 * LH:2 * LH] + 0.5
        g = th[:, 2 * LH:3 * LH]
        o = 0.5 * th[:, 3 * LH:4 * LH] + 0.5

        c_new = f * c + i * g
        h_new = o * jnp.tanh(c_new)

        lo = max(0, s - T + 1)            # first active layer this step
        hi = min(L - 1, s)                # last active layer this step
        if lo == 0 and hi == L - 1:       # interior steps: all layers active
            h, c = h_new, c_new
        else:                             # wavefront edges: static lane mask
            lane = lax.broadcasted_iota(jnp.int32, (1, LH), 1)
            m = (lane >= lo * H) & (lane < (hi + 1) * H)
            h = jnp.where(m, h_new, h)
            c = jnp.where(m, c_new, c)

    # Epilogue: final states + Linear (VPU mul + lane reduce; no MXU).
    for l in range(L):
        hn_ref[pl.ds(l, 1), :] = h[:, l * H:(l + 1) * H]
        cn_ref[pl.ds(l, 1), :] = c[:, l * H:(l + 1) * H]
    h_top = h[:, (L - 1) * H:L * H]
    # Dropout on hn[-1] is identity at inference (eval mode).
    # TODO(synk): stochastic training-mode dropout not implemented.
    out_ref[...] = (jnp.sum(h_top * wlin_ref[...], axis=-1, keepdims=True)
                    + blin_ref[...])


def init_params(key, n_inputs, hidden, num_layers):
    """Deterministic PyTorch-style uniform(-1/sqrt(H), 1/sqrt(H)) init."""
    d_in = n_inputs + 1
    k = 1.0 / jnp.sqrt(jnp.float32(hidden))
    keys = jax.random.split(key, 4 * num_layers + 2)
    layers = []
    for l in range(num_layers):
        in_size = d_in if l == 0 else hidden
        kw = keys[4 * l:4 * l + 4]
        w_ih = jax.random.uniform(kw[0], (4 * hidden, in_size), jnp.float32, -k, k)
        w_hh = jax.random.uniform(kw[1], (4 * hidden, hidden), jnp.float32, -k, k)
        b_ih = jax.random.uniform(kw[2], (4 * hidden,), jnp.float32, -k, k)
        b_hh = jax.random.uniform(kw[3], (4 * hidden,), jnp.float32, -k, k)
        layers.append((w_ih, w_hh, b_ih, b_hh))
    lin_w = jax.random.uniform(keys[-2], (1, hidden), jnp.float32, -k, k)
    lin_b = jax.random.uniform(keys[-1], (1,), jnp.float32, -k, k)
    return layers, lin_w, lin_b


def pack_params(layers, lin_w, lin_b, hidden, num_layers):
    """Pack PyTorch-layout weights into the fused wavefront kernel layout.

    Fused gate column order: [i_0..i_{L-1} | f_0.. | g_0.. | o_0..], each block
    H wide. i/f/o columns are pre-scaled by 0.5 in f32 (sigmoid-via-tanh) before
    the bf16 cast. Run once; reuse across forward calls.
    """
    H, L = hidden, num_layers
    LH, G = L * H, 4 * L * H
    d_in = layers[0][0].shape[1]

    w_big = jnp.zeros((LH, G), jnp.float32)    # fused recurrent + inter-layer
    w_x = jnp.zeros((H, G), jnp.float32)       # layer-0 input proj (row-padded)
    b_full = jnp.zeros((G,), jnp.float32)

    for l, (w_ih, w_hh, b_ih, b_hh) in enumerate(layers):
        b = b_ih + b_hh
        for q in range(4):                     # PyTorch gate order i, f, g, o
            cols = slice(q * LH + l * H, q * LH + (l + 1) * H)
            w_big = w_big.at[l * H:(l + 1) * H, cols].set(
                w_hh[q * H:(q + 1) * H, :].T)
            if l == 0:
                w_x = w_x.at[:d_in, cols].set(w_ih[q * H:(q + 1) * H, :].T)
            else:
                w_big = w_big.at[(l - 1) * H:l * H, cols].set(
                    w_ih[q * H:(q + 1) * H, :].T)
            b_full = b_full.at[cols].set(b[q * H:(q + 1) * H])

    scale = jnp.ones((G,), jnp.float32)
    for q in (0, 1, 3):                        # i, f, o columns -> * 0.5
        scale = scale.at[q * LH:(q + 1) * LH].set(0.5)
    w_big = (w_big * scale[None, :]).astype(jnp.bfloat16)
    w_x = w_x * scale[None, :]
    b_full = (b_full * scale)[None, :]

    return dict(w_x=w_x, w_big=w_big, b_full=b_full,
                w_lin=lin_w, b_lin=lin_b.reshape(1, 1))


def lstm_forward(x, packed, hidden, num_layers):
    """Equivalent of LSTM.forward(x) with init_hc=None, eval-mode dropout."""
    assert x.ndim == 3 and x.shape[0] == 1, "module hard-codes batch size 1"
    T, d_in = x.shape[1], x.shape[2]
    H, L = hidden, num_layers
    assert d_in <= H, "kernel pads layer-0 features up to hidden width"

    x_pad = jnp.pad(x[0].astype(jnp.float32), ((0, 0), (0, H - d_in)))  # (T, H)

    kernel = functools.partial(_lstm_wavefront_kernel,
                               num_layers=L, seq_len=T, hidden=H)
    out, hn, cn = pl.pallas_call(
        kernel,
        out_shape=(
            jax.ShapeDtypeStruct((1, 1), jnp.float32),
            jax.ShapeDtypeStruct((L, H), jnp.float32),
            jax.ShapeDtypeStruct((L, H), jnp.float32),
        ),
        in_specs=[pl.BlockSpec(memory_space=pltpu.MemorySpace.VMEM)] * 6,
        out_specs=(pl.BlockSpec(memory_space=pltpu.MemorySpace.VMEM),) * 3,
    )(x_pad, packed["w_x"], packed["w_big"], packed["b_full"],
      packed["w_lin"], packed["b_lin"])

    out_flat = out.reshape(-1)                 # == linear(hn[-1]).flatten()
    return out_flat, jnp.array([1], jnp.int32), (hn[:, None, :], cn[:, None, :])


def lstm_reference(x, layers, lin_w, lin_b):
    """Pure-JAX f32 reference of the PyTorch forward (batch=1, eval mode)."""
    seq = x[0]  # (T, D0)
    hs, cs = [], []
    for (w_ih, w_hh, b_ih, b_hh) in layers:
        H = w_hh.shape[1]
        h = jnp.zeros((H,), jnp.float32)
        c = jnp.zeros((H,), jnp.float32)
        outs = []
        for t in range(seq.shape[0]):
            gates = w_ih @ seq[t] + b_ih + w_hh @ h + b_hh
            i, f, g, o = jnp.split(gates, 4)
            i, f, o = jax.nn.sigmoid(i), jax.nn.sigmoid(f), jax.nn.sigmoid(o)
            g = jnp.tanh(g)
            c = f * c + i * g
            h = o * jnp.tanh(c)
            outs.append(h)
        seq = jnp.stack(outs)
        hs.append(h)
        cs.append(c)
    out = lin_w @ hs[-1] + lin_b
    return out, jnp.stack(hs)[:, None, :], jnp.stack(cs)[:, None, :]


if __name__ == "__main__":
    # settings = {'num_hidden_units': 32, 'num_lstm_layers': 2,
    #             'neuron_dropout': 0.0, 'batch_size': 1}
    n_inputs = 7            # module uses n_inputs + 1 = 8 input features
    hidden = 32
    num_layers = 2
    seq_len = 8

    key = jax.random.PRNGKey(0)
    kp, kx = jax.random.split(key)
    layers, lin_w, lin_b = init_params(kp, n_inputs, hidden, num_layers)
    x = jax.random.normal(kx, (1, seq_len, n_inputs + 1), jnp.float32)

    packed = pack_params(layers, lin_w, lin_b, hidden, num_layers)  # pack once
    fwd = jax.jit(lstm_forward, static_argnums=(2, 3))
    out, flag, (hn, cn) = fwd(x, packed, hidden, num_layers)
    jax.block_until_ready((out, hn, cn))

    # Reference is pure f32; the kernel feeds the MXU bf16 operands on the
    # recurrent path, so the tolerance covers bf16 error over the recurrence.
    ref_out, ref_hn, ref_cn = lstm_reference(x, layers, lin_w, lin_b)
    assert jnp.allclose(out, ref_out, atol=5e-2, rtol=5e-2)
    assert jnp.allclose(hn, ref_hn, atol=5e-2, rtol=5e-2)
    assert jnp.allclose(cn, ref_cn, atol=5e-2, rtol=5e-2)

    print("KERNEL_OK")
</pallas_src>

<mosaic_0001>
module attributes {stable_mosaic.version = 11 : i64} {
  func.func @_lstm_wavefront_kernel(%arg0: memref<8x32xf32, #tpu.memory_space<vmem>>, %arg1: memref<32x256xf32, #tpu.memory_space<vmem>>, %arg2: memref<64x256xbf16, #tpu.memory_space<vmem>>, %arg3: memref<1x256xf32, #tpu.memory_space<vmem>>, %arg4: memref<1x32xf32, #tpu.memory_space<vmem>>, %arg5: memref<1x1xf32, #tpu.memory_space<vmem>>, %arg6: memref<1x1xf32, #tpu.memory_space<vmem>>, %arg7: memref<2x32xf32, #tpu.memory_space<vmem>>, %arg8: memref<2x32xf32, #tpu.memory_space<vmem>>) attributes {dimension_semantics = [], scalar_prefetch = 0 : i64, scratch_operands = 0 : i64, tpu.core_type = #tpu.core_type<tc>} {
    %c0 = arith.constant 0 : index
    %c0_0 = arith.constant 0 : index
    %0 = vector.load %arg3[%c0, %c0_0] : memref<1x256xf32, #tpu.memory_space<vmem>>, vector<1x256xf32>
    %c0_1 = arith.constant 0 : index
    %c0_2 = arith.constant 0 : index
    %1 = vector.load %arg0[%c0_1, %c0_2] : memref<8x32xf32, #tpu.memory_space<vmem>>, vector<8x32xf32>
    %c0_3 = arith.constant 0 : index
    %c0_4 = arith.constant 0 : index
    %2 = vector.load %arg1[%c0_3, %c0_4] : memref<32x256xf32, #tpu.memory_space<vmem>>, vector<32x256xf32>
    %cst = arith.constant dense<0.000000e+00> : vector<8x256xf32>
    %3 = tpu.matmul %1, %2, %cst {dimension_numbers = #tpu.dot_dimension_numbers<[1], [0], [0], [1], [0, 0, 1, 1], [], []>} : vector<8x32xf32>, vector<32x256xf32>, vector<8x256xf32> -> vector<8x256xf32>
    %4 = vector.broadcast %0 : vector<1x256xf32> to vector<8x256xf32>
    %5 = arith.addf %3, %4 : vector<8x256xf32>
    %c0_5 = arith.constant 0 : index
    %c0_6 = arith.constant 0 : index
    %6 = vector.load %arg2[%c0_5, %c0_6] : memref<64x256xbf16, #tpu.memory_space<vmem>>, vector<64x256xbf16>
    %cst_7 = arith.constant 0.000000e+00 : f32
    %7 = vector.broadcast %cst_7 : f32 to vector<1x64xf32>
    %cst_8 = arith.constant 0.000000e+00 : f32
    %8 = vector.broadcast %cst_8 : f32 to vector<1x64xf32>
    %9 = vector.extract_strided_slice %5 {offsets = [0, 0], sizes = [1, 256], strides = [1, 1]} : vector<8x256xf32> to vector<1x256xf32>
    %10 = arith.truncf %7 : vector<1x64xf32> to vector<1x64xbf16>
    %cst_9 = arith.constant dense<0.000000e+00> : vector<1x256xf32>
    %11 = tpu.matmul %10, %6, %cst_9 {dimension_numbers = #tpu.dot_dimension_numbers<[1], [0], [0], [1], [0, 0, 1, 1], [], []>} : vector<1x64xbf16>, vector<64x256xbf16>, vector<1x256xf32> -> vector<1x256xf32>
    %12 = arith.addf %9, %11 : vector<1x256xf32>
    %13 = math.tanh %12 : vector<1x256xf32>
    %14 = vector.extract_strided_slice %13 {offsets = [0, 0], sizes = [1, 64], strides = [1, 1]} : vector<1x256xf32> to vector<1x64xf32>
    %cst_10 = arith.constant 5.000000e-01 : f32
    %15 = vector.broadcast %cst_10 : f32 to vector<1x64xf32>
    %16 = arith.mulf %15, %14 : vector<1x64xf32>
    %cst_11 = arith.constant 5.000000e-01 : f32
    %17 = vector.broadcast %cst_11 : f32 to vector<1x64xf32>
    %18 = arith.addf %16, %17 : vector<1x64xf32>
    %19 = vector.extract_strided_slice %13 {offsets = [0, 64], sizes = [1, 64], strides = [1, 1]} : vector<1x256xf32> to vector<1x64xf32>
    %cst_12 = arith.constant 5.000000e-01 : f32
    %20 = vector.broadcast %cst_12 : f32 to vector<1x64xf32>
    %21 = arith.mulf %20, %19 : vector<1x64xf32>
    %cst_13 = arith.constant 5.000000e-01 : f32
    %22 = vector.broadcast %cst_13 : f32 to vector<1x64xf32>
    %23 = arith.addf %21, %22 : vector<1x64xf32>
    %24 = vector.extract_strided_slice %13 {offsets = [0, 128], sizes = [1, 64], strides = [1, 1]} : vector<1x256xf32> to vector<1x64xf32>
    %25 = vector.extract_strided_slice %13 {offsets = [0, 192], sizes = [1, 64], strides = [1, 1]} : vector<1x256xf32> to vector<1x64xf32>
    %cst_14 = arith.constant 5.000000e-01 : f32
    %26 = vector.broadcast %cst_14 : f32 to vector<1x64xf32>
    %27 = arith.mulf %26, %25 : vector<1x64xf32>
    %cst_15 = arith.constant 5.000000e-01 : f32
    %28 = vector.broadcast %cst_15 : f32 to vector<1x64xf32>
    %29 = arith.addf %27, %28 : vector<1x64xf32>
    %30 = arith.mulf %23, %8 : vector<1x64xf32>
    %31 = arith.mulf %18, %24 : vector<1x64xf32>
    %32 = arith.addf %30, %31 : vector<1x64xf32>
    %33 = math.tanh %32 : vector<1x64xf32>
    %34 = arith.mulf %29, %33 : vector<1x64xf32>
    %35 = tpu.iota {dimensions = array<i32: 1>} : vector<1x64xi32>
    %c0_i32 = arith.constant 0 : i32
    %36 = vector.broadcast %c0_i32 : i32 to vector<1x64xi32>
    %37 = arith.cmpi sge, %35, %36 : vector<1x64xi32>
    %c32_i32 = arith.constant 32 : i32
    %38 = vector.broadcast %c32_i32 : i32 to vector<1x64xi32>
    %39 = arith.cmpi slt, %35, %38 : vector<1x64xi32>
    %40 = arith.andi %37, %39 : vector<1x64xi1>
    %41 = arith.select %40, %34, %7 : vector<1x64xi1>, vector<1x64xf32>
    %42 = arith.select %40, %32, %8 : vector<1x64xi1>, vector<1x64xf32>
    %43 = vector.extract_strided_slice %5 {offsets = [1, 0], sizes = [1, 256], strides = [1, 1]} : vector<8x256xf32> to vector<1x256xf32>
    %44 = arith.truncf %41 : vector<1x64xf32> to vector<1x64xbf16>
    %cst_16 = arith.constant dense<0.000000e+00> : vector<1x256xf32>
    %45 = tpu.matmul %44, %6, %cst_16 {dimension_numbers = #tpu.dot_dimension_numbers<[1], [0], [0], [1], [0, 0, 1, 1], [], []>} : vector<1x64xbf16>, vector<64x256xbf16>, vector<1x256xf32> -> vector<1x256xf32>
    %46 = arith.addf %43, %45 : vector<1x256xf32>
    %47 = math.tanh %46 : vector<1x256xf32>
    %48 = vector.extract_strided_slice %47 {offsets = [0, 0], sizes = [1, 64], strides = [1, 1]} : vector<1x256xf32> to vector<1x64xf32>
    %cst_17 = arith.constant 5.000000e-01 : f32
    %49 = vector.broadcast %cst_17 : f32 to vector<1x64xf32>
    %50 = arith.mulf %49, %48 : vector<1x64xf32>
    %cst_18 = arith.constant 5.000000e-01 : f32
    %51 = vector.broadcast %cst_18 : f32 to vector<1x64xf32>
    %52 = arith.addf %50, %51 : vector<1x64xf32>
    %53 = vector.extract_strided_slice %47 {offsets = [0, 64], sizes = [1, 64], strides = [1, 1]} : vector<1x256xf32> to vector<1x64xf32>
    %cst_19 = arith.constant 5.000000e-01 : f32
    %54 = vector.broadcast %cst_19 : f32 to vector<1x64xf32>
    %55 = arith.mulf %54, %53 : vector<1x64xf32>
    %cst_20 = arith.constant 5.000000e-01 : f32
    %56 = vector.broadcast %cst_20 : f32 to vector<1x64xf32>
    %57 = arith.addf %55, %56 : vector<1x64xf32>
    %58 = vector.extract_strided_slice %47 {offsets = [0, 128], sizes = [1, 64], strides = [1, 1]} : vector<1x256xf32> to vector<1x64xf32>
    %59 = vector.extract_strided_slice %47 {offsets = [0, 192], sizes = [1, 64], strides = [1, 1]} : vector<1x256xf32> to vector<1x64xf32>
    %cst_21 = arith.constant 5.000000e-01 : f32
    %60 = vector.broadcast %cst_21 : f32 to vector<1x64xf32>
    %61 = arith.mulf %60, %59 : vector<1x64xf32>
    %cst_22 = arith.constant 5.000000e-01 : f32
    %62 = vector.broadcast %cst_22 : f32 to vector<1x64xf32>
    %63 = arith.addf %61, %62 : vector<1x64xf32>
    %64 = arith.mulf %57, %42 : vector<1x64xf32>
    %65 = arith.mulf %52, %58 : vector<1x64xf32>
    %66 = arith.addf %64, %65 : vector<1x64xf32>
    %67 = math.tanh %66 : vector<1x64xf32>
    %68 = arith.mulf %63, %67 : vector<1x64xf32>
    %69 = vector.extract_strided_slice %5 {offsets = [2, 0], sizes = [1, 256], strides = [1, 1]} : vector<8x256xf32> to vector<1x256xf32>
    %70 = arith.truncf %68 : vector<1x64xf32> to vector<1x64xbf16>
    %cst_23 = arith.constant dense<0.000000e+00> : vector<1x256xf32>
    %71 = tpu.matmul %70, %6, %cst_23 {dimension_numbers = #tpu.dot_dimension_numbers<[1], [0], [0], [1], [0, 0, 1, 1], [], []>} : vector<1x64xbf16>, vector<64x256xbf16>, vector<1x256xf32> -> vector<1x256xf32>
    %72 = arith.addf %69, %71 : vector<1x256xf32>
    %73 = math.tanh %72 : vector<1x256xf32>
    %74 = vector.extract_strided_slice %73 {offsets = [0, 0], sizes = [1, 64], strides = [1, 1]} : vector<1x256xf32> to vector<1x64xf32>
    %cst_24 = arith.constant 5.000000e-01 : f32
    %75 = vector.broadcast %cst_24 : f32 to vector<1x64xf32>
    %76 = arith.mulf %75, %74 : vector<1x64xf32>
    %cst_25 = arith.constant 5.000000e-01 : f32
    %77 = vector.broadcast %cst_25 : f32 to vector<1x64xf32>
    %78 = arith.addf %76, %77 : vector<1x64xf32>
    %79 = vector.extract_strided_slice %73 {offsets = [0, 64], sizes = [1, 64], strides = [1, 1]} : vector<1x256xf32> to vector<1x64xf32>
    %cst_26 = arith.constant 5.000000e-01 : f32
    %80 = vector.broadcast %cst_26 : f32 to vector<1x64xf32>
    %81 = arith.mulf %80, %79 : vector<1x64xf32>
    %cst_27 = arith.constant 5.000000e-01 : f32
    %82 = vector.broadcast %cst_27 : f32 to vector<1x64xf32>
    %83 = arith.addf %81, %82 : vector<1x64xf32>
    %84 = vector.extract_strided_slice %73 {offsets = [0, 128], sizes = [1, 64], strides = [1, 1]} : vector<1x256xf32> to vector<1x64xf32>
    %85 = vector.extract_strided_slice %73 {offsets = [0, 192], sizes = [1, 64], strides = [1, 1]} : vector<1x256xf32> to vector<1x64xf32>
    %cst_28 = arith.constant 5.000000e-01 : f32
    %86 = vector.broadcast %cst_28 : f32 to vector<1x64xf32>
    %87 = arith.mulf %86, %85 : vector<1x64xf32>
    %cst_29 = arith.constant 5.000000e-01 : f32
    %88 = vector.broadcast %cst_29 : f32 to vector<1x64xf32>
    %89 = arith.addf %87, %88 : vector<1x64xf32>
    %90 = arith.mulf %83, %66 : vector<1x64xf32>
    %91 = arith.mulf %78, %84 : vector<1x64xf32>
    %92 = arith.addf %90, %91 : vector<1x64xf32>
    %93 = math.tanh %92 : vector<1x64xf32>
    %94 = arith.mulf %89, %93 : vector<1x64xf32>
    %95 = vector.extract_strided_slice %5 {offsets = [3, 0], sizes = [1, 256], strides = [1, 1]} : vector<8x256xf32> to vector<1x256xf32>
    %96 = arith.truncf %94 : vector<1x64xf32> to vector<1x64xbf16>
    %cst_30 = arith.constant dense<0.000000e+00> : vector<1x256xf32>
    %97 = tpu.matmul %96, %6, %cst_30 {dimension_numbers = #tpu.dot_dimension_numbers<[1], [0], [0], [1], [0, 0, 1, 1], [], []>} : vector<1x64xbf16>, vector<64x256xbf16>, vector<1x256xf32> -> vector<1x256xf32>
    %98 = arith.addf %95, %97 : vector<1x256xf32>
    %99 = math.tanh %98 : vector<1x256xf32>
    %100 = vector.extract_strided_slice %99 {offsets = [0, 0], sizes = [1, 64], strides = [1, 1]} : vector<1x256xf32> to vector<1x64xf32>
    %cst_31 = arith.constant 5.000000e-01 : f32
    %101 = vector.broadcast %cst_31 : f32 to vector<1x64xf32>
    %102 = arith.mulf %101, %100 : vector<1x64xf32>
    %cst_32 = arith.constant 5.000000e-01 : f32
    %103 = vector.broadcast %cst_32 : f32 to vector<1x64xf32>
    %104 = arith.addf %102, %103 : vector<1x64xf32>
    %105 = vector.extract_strided_slice %99 {offsets = [0, 64], sizes = [1, 64], strides = [1, 1]} : vector<1x256xf32> to vector<1x64xf32>
    %cst_33 = arith.constant 5.000000e-01 : f32
    %106 = vector.broadcast %cst_33 : f32 to vector<1x64xf32>
    %107 = arith.mulf %106, %105 : vector<1x64xf32>
    %cst_34 = arith.constant 5.000000e-01 : f32
    %108 = vector.broadcast %cst_34 : f32 to vector<1x64xf32>
    %109 = arith.addf %107, %108 : vector<1x64xf32>
    %110 = vector.extract_strided_slice %99 {offsets = [0, 128], sizes = [1, 64], strides = [1, 1]} : vector<1x256xf32> to vector<1x64xf32>
    %111 = vector.extract_strided_slice %99 {offsets = [0, 192], sizes = [1, 64], strides = [1, 1]} : vector<1x256xf32> to vector<1x64xf32>
    %cst_35 = arith.constant 5.000000e-01 : f32
    %112 = vector.broadcast %cst_35 : f32 to vector<1x64xf32>
    %113 = arith.mulf %112, %111 : vector<1x64xf32>
    %cst_36 = arith.constant 5.000000e-01 : f32
    %114 = vector.broadcast %cst_36 : f32 to vector<1x64xf32>
    %115 = arith.addf %113, %114 : vector<1x64xf32>
    %116 = arith.mulf %109, %92 : vector<1x64xf32>
    %117 = arith.mulf %104, %110 : vector<1x64xf32>
    %118 = arith.addf %116, %117 : vector<1x64xf32>
    %119 = math.tanh %118 : vector<1x64xf32>
    %120 = arith.mulf %115, %119 : vector<1x64xf32>
    %121 = vector.extract_strided_slice %5 {offsets = [4, 0], sizes = [1, 256], strides = [1, 1]} : vector<8x256xf32> to vector<1x256xf32>
    %122 = arith.truncf %120 : vector<1x64xf32> to vector<1x64xbf16>
    %cst_37 = arith.constant dense<0.000000e+00> : vector<1x256xf32>
    %123 = tpu.matmul %122, %6, %cst_37 {dimension_numbers = #tpu.dot_dimension_numbers<[1], [0], [0], [1], [0, 0, 1, 1], [], []>} : vector<1x64xbf16>, vector<64x256xbf16>, vector<1x256xf32> -> vector<1x256xf32>
    %124 = arith.addf %121, %123 : vector<1x256xf32>
    %125 = math.tanh %124 : vector<1x256xf32>
    %126 = vector.extract_strided_slice %125 {offsets = [0, 0], sizes = [1, 64], strides = [1, 1]} : vector<1x256xf32> to vector<1x64xf32>
    %cst_38 = arith.constant 5.000000e-01 : f32
    %127 = vector.broadcast %cst_38 : f32 to vector<1x64xf32>
    %128 = arith.mulf %127, %126 : vector<1x64xf32>
    %cst_39 = arith.constant 5.000000e-01 : f32
    %129 = vector.broadcast %cst_39 : f32 to vector<1x64xf32>
    %130 = arith.addf %128, %129 : vector<1x64xf32>
    %131 = vector.extract_strided_slice %125 {offsets = [0, 64], sizes = [1, 64], strides = [1, 1]} : vector<1x256xf32> to vector<1x64xf32>
    %cst_40 = arith.constant 5.000000e-01 : f32
    %132 = vector.broadcast %cst_40 : f32 to vector<1x64xf32>
    %133 = arith.mulf %132, %131 : vector<1x64xf32>
    %cst_41 = arith.constant 5.000000e-01 : f32
    %134 = vector.broadcast %cst_41 : f32 to vector<1x64xf32>
    %135 = arith.addf %133, %134 : vector<1x64xf32>
    %136 = vector.extract_strided_slice %125 {offsets = [0, 128], sizes = [1, 64], strides = [1, 1]} : vector<1x256xf32> to vector<1x64xf32>
    %137 = vector.extract_strided_slice %125 {offsets = [0, 192], sizes = [1, 64], strides = [1, 1]} : vector<1x256xf32> to vector<1x64xf32>
    %cst_42 = arith.constant 5.000000e-01 : f32
    %138 = vector.broadcast %cst_42 : f32 to vector<1x64xf32>
    %139 = arith.mulf %138, %137 : vector<1x64xf32>
    %cst_43 = arith.constant 5.000000e-01 : f32
    %140 = vector.broadcast %cst_43 : f32 to vector<1x64xf32>
    %141 = arith.addf %139, %140 : vector<1x64xf32>
    %142 = arith.mulf %135, %118 : vector<1x64xf32>
    %143 = arith.mulf %130, %136 : vector<1x64xf32>
    %144 = arith.addf %142, %143 : vector<1x64xf32>
    %145 = math.tanh %144 : vector<1x64xf32>
    %146 = arith.mulf %141, %145 : vector<1x64xf32>
    %147 = vector.extract_strided_slice %5 {offsets = [5, 0], sizes = [1, 256], strides = [1, 1]} : vector<8x256xf32> to vector<1x256xf32>
    %148 = arith.truncf %146 : vector<1x64xf32> to vector<1x64xbf16>
    %cst_44 = arith.constant dense<0.000000e+00> : vector<1x256xf32>
    %149 = tpu.matmul %148, %6, %cst_44 {dimension_numbers = #tpu.dot_dimension_numbers<[1], [0], [0], [1], [0, 0, 1, 1], [], []>} : vector<1x64xbf16>, vector<64x256xbf16>, vector<1x256xf32> -> vector<1x256xf32>
    %150 = arith.addf %147, %149 : vector<1x256xf32>
    %151 = math.tanh %150 : vector<1x256xf32>
    %152 = vector.extract_strided_slice %151 {offsets = [0, 0], sizes = [1, 64], strides = [1, 1]} : vector<1x256xf32> to vector<1x64xf32>
    %cst_45 = arith.constant 5.000000e-01 : f32
    %153 = vector.broadcast %cst_45 : f32 to vector<1x64xf32>
    %154 = arith.mulf %153, %152 : vector<1x64xf32>
    %cst_46 = arith.constant 5.000000e-01 : f32
    %155 = vector.broadcast %cst_46 : f32 to vector<1x64xf32>
    %156 = arith.addf %154, %155 : vector<1x64xf32>
    %157 = vector.extract_strided_slice %151 {offsets = [0, 64], sizes = [1, 64], strides = [1, 1]} : vector<1x256xf32> to vector<1x64xf32>
    %cst_47 = arith.constant 5.000000e-01 : f32
    %158 = vector.broadcast %cst_47 : f32 to vector<1x64xf32>
    %159 = arith.mulf %158, %157 : vector<1x64xf32>
    %cst_48 = arith.constant 5.000000e-01 : f32
    %160 = vector.broadcast %cst_48 : f32 to vector<1x64xf32>
    %161 = arith.addf %159, %160 : vector<1x64xf32>
    %162 = vector.extract_strided_slice %151 {offsets = [0, 128], sizes = [1, 64], strides = [1, 1]} : vector<1x256xf32> to vector<1x64xf32>
    %163 = vector.extract_strided_slice %151 {offsets = [0, 192], sizes = [1, 64], strides = [1, 1]} : vector<1x256xf32> to vector<1x64xf32>
    %cst_49 = arith.constant 5.000000e-01 : f32
    %164 = vector.broadcast %cst_49 : f32 to vector<1x64xf32>
    %165 = arith.mulf %164, %163 : vector<1x64xf32>
    %cst_50 = arith.constant 5.000000e-01 : f32
    %166 = vector.broadcast %cst_50 : f32 to vector<1x64xf32>
    %167 = arith.addf %165, %166 : vector<1x64xf32>
    %168 = arith.mulf %161, %144 : vector<1x64xf32>
    %169 = arith.mulf %156, %162 : vector<1x64xf32>
    %170 = arith.addf %168, %169 : vector<1x64xf32>
    %171 = math.tanh %170 : vector<1x64xf32>
    %172 = arith.mulf %167, %171 : vector<1x64xf32>
    %173 = vector.extract_strided_slice %5 {offsets = [6, 0], sizes = [1, 256], strides = [1, 1]} : vector<8x256xf32> to vector<1x256xf32>
    %174 = arith.truncf %172 : vector<1x64xf32> to vector<1x64xbf16>
    %cst_51 = arith.constant dense<0.000000e+00> : vector<1x256xf32>
    %175 = tpu.matmul %174, %6, %cst_51 {dimension_numbers = #tpu.dot_dimension_numbers<[1], [0], [0], [1], [0, 0, 1, 1], [], []>} : vector<1x64xbf16>, vector<64x256xbf16>, vector<1x256xf32> -> vector<1x256xf32>
    %176 = arith.addf %173, %175 : vector<1x256xf32>
    %177 = math.tanh %176 : vector<1x256xf32>
    %178 = vector.extract_strided_slice %177 {offsets = [0, 0], sizes = [1, 64], strides = [1, 1]} : vector<1x256xf32> to vector<1x64xf32>
    %cst_52 = arith.constant 5.000000e-01 : f32
    %179 = vector.broadcast %cst_52 : f32 to vector<1x64xf32>
    %180 = arith.mulf %179, %178 : vector<1x64xf32>
    %cst_53 = arith.constant 5.000000e-01 : f32
    %181 = vector.broadcast %cst_53 : f32 to vector<1x64xf32>
    %182 = arith.addf %180, %181 : vector<1x64xf32>
    %183 = vector.extract_strided_slice %177 {offsets = [0, 64], sizes = [1, 64], strides = [1, 1]} : vector<1x256xf32> to vector<1x64xf32>
    %cst_54 = arith.constant 5.000000e-01 : f32
    %184 = vector.broadcast %cst_54 : f32 to vector<1x64xf32>
    %185 = arith.mulf %184, %183 : vector<1x64xf32>
    %cst_55 = arith.constant 5.000000e-01 : f32
    %186 = vector.broadcast %cst_55 : f32 to vector<1x64xf32>
    %187 = arith.addf %185, %186 : vector<1x64xf32>
    %188 = vector.extract_strided_slice %177 {offsets = [0, 128], sizes = [1, 64], strides = [1, 1]} : vector<1x256xf32> to vector<1x64xf32>
    %189 = vector.extract_strided_slice %177 {offsets = [0, 192], sizes = [1, 64], strides = [1, 1]} : vector<1x256xf32> to vector<1x64xf32>
    %cst_56 = arith.constant 5.000000e-01 : f32
    %190 = vector.broadcast %cst_56 : f32 to vector<1x64xf32>
    %191 = arith.mulf %190, %189 : vector<1x64xf32>
    %cst_57 = arith.constant 5.000000e-01 : f32
    %192 = vector.broadcast %cst_57 : f32 to vector<1x64xf32>
    %193 = arith.addf %191, %192 : vector<1x64xf32>
    %194 = arith.mulf %187, %170 : vector<1x64xf32>
    %195 = arith.mulf %182, %188 : vector<1x64xf32>
    %196 = arith.addf %194, %195 : vector<1x64xf32>
    %197 = math.tanh %196 : vector<1x64xf32>
    %198 = arith.mulf %193, %197 : vector<1x64xf32>
    %199 = vector.extract_strided_slice %5 {offsets = [7, 0], sizes = [1, 256], strides = [1, 1]} : vector<8x256xf32> to vector<1x256xf32>
    %200 = arith.truncf %198 : vector<1x64xf32> to vector<1x64xbf16>
    %cst_58 = arith.constant dense<0.000000e+00> : vector<1x256xf32>
    %201 = tpu.matmul %200, %6, %cst_58 {dimension_numbers = #tpu.dot_dimension_numbers<[1], [0], [0], [1], [0, 0, 1, 1], [], []>} : vector<1x64xbf16>, vector<64x256xbf16>, vector<1x256xf32> -> vector<1x256xf32>
    %202 = arith.addf %199, %201 : vector<1x256xf32>
    %203 = math.tanh %202 : vector<1x256xf32>
    %204 = vector.extract_strided_slice %203 {offsets = [0, 0], sizes = [1, 64], strides = [1, 1]} : vector<1x256xf32> to vector<1x64xf32>
    %cst_59 = arith.constant 5.000000e-01 : f32
    %205 = vector.broadcast %cst_59 : f32 to vector<1x64xf32>
    %206 = arith.mulf %205, %204 : vector<1x64xf32>
    %cst_60 = arith.constant 5.000000e-01 : f32
    %207 = vector.broadcast %cst_60 : f32 to vector<1x64xf32>
    %208 = arith.addf %206, %207 : vector<1x64xf32>
    %209 = vector.extract_strided_slice %203 {offsets = [0, 64], sizes = [1, 64], strides = [1, 1]} : vector<1x256xf32> to vector<1x64xf32>
    %cst_61 = arith.constant 5.000000e-01 : f32
    %210 = vector.broadcast %cst_61 : f32 to vector<1x64xf32>
    %211 = arith.mulf %210, %209 : vector<1x64xf32>
    %cst_62 = arith.constant 5.000000e-01 : f32
    %212 = vector.broadcast %cst_62 : f32 to vector<1x64xf32>
    %213 = arith.addf %211, %212 : vector<1x64xf32>
    %214 = vector.extract_strided_slice %203 {offsets = [0, 128], sizes = [1, 64], strides = [1, 1]} : vector<1x256xf32> to vector<1x64xf32>
    %215 = vector.extract_strided_slice %203 {offsets = [0, 192], sizes = [1, 64], strides = [1, 1]} : vector<1x256xf32> to vector<1x64xf32>
    %cst_63 = arith.constant 5.000000e-01 : f32
    %216 = vector.broadcast %cst_63 : f32 to vector<1x64xf32>
    %217 = arith.mulf %216, %215 : vector<1x64xf32>
    %cst_64 = arith.constant 5.000000e-01 : f32
    %218 = vector.broadcast %cst_64 : f32 to vector<1x64xf32>
    %219 = arith.addf %217, %218 : vector<1x64xf32>
    %220 = arith.mulf %213, %196 : vector<1x64xf32>
    %221 = arith.mulf %208, %214 : vector<1x64xf32>
    %222 = arith.addf %220, %221 : vector<1x64xf32>
    %223 = math.tanh %222 : vector<1x64xf32>
    %224 = arith.mulf %219, %223 : vector<1x64xf32>
    %225 = arith.truncf %224 : vector<1x64xf32> to vector<1x64xbf16>
    %cst_65 = arith.constant dense<0.000000e+00> : vector<1x256xf32>
    %226 = tpu.matmul %225, %6, %cst_65 {dimension_numbers = #tpu.dot_dimension_numbers<[1], [0], [0], [1], [0, 0, 1, 1], [], []>} : vector<1x64xbf16>, vector<64x256xbf16>, vector<1x256xf32> -> vector<1x256xf32>
    %227 = arith.addf %0, %226 : vector<1x256xf32>
    %228 = math.tanh %227 : vector<1x256xf32>
    %229 = vector.extract_strided_slice %228 {offsets = [0, 0], sizes = [1, 64], strides = [1, 1]} : vector<1x256xf32> to vector<1x64xf32>
    %cst_66 = arith.constant 5.000000e-01 : f32
    %230 = vector.broadcast %cst_66 : f32 to vector<1x64xf32>
    %231 = arith.mulf %230, %229 : vector<1x64xf32>
    %cst_67 = arith.constant 5.000000e-01 : f32
    %232 = vector.broadcast %cst_67 : f32 to vector<1x64xf32>
    %233 = arith.addf %231, %232 : vector<1x64xf32>
    %234 = vector.extract_strided_slice %228 {offsets = [0, 64], sizes = [1, 64], strides = [1, 1]} : vector<1x256xf32> to vector<1x64xf32>
    %cst_68 = arith.constant 5.000000e-01 : f32
    %235 = vector.broadcast %cst_68 : f32 to vector<1x64xf32>
    %236 = arith.mulf %235, %234 : vector<1x64xf32>
    %cst_69 = arith.constant 5.000000e-01 : f32
    %237 = vector.broadcast %cst_69 : f32 to vector<1x64xf32>
    %238 = arith.addf %236, %237 : vector<1x64xf32>
    %239 = vector.extract_strided_slice %228 {offsets = [0, 128], sizes = [1, 64], strides = [1, 1]} : vector<1x256xf32> to vector<1x64xf32>
    %240 = vector.extract_strided_slice %228 {offsets = [0, 192], sizes = [1, 64], strides = [1, 1]} : vector<1x256xf32> to vector<1x64xf32>
    %cst_70 = arith.constant 5.000000e-01 : f32
    %241 = vector.broadcast %cst_70 : f32 to vector<1x64xf32>
    %242 = arith.mulf %241, %240 : vector<1x64xf32>
    %cst_71 = arith.constant 5.000000e-01 : f32
    %243 = vector.broadcast %cst_71 : f32 to vector<1x64xf32>
    %244 = arith.addf %242, %243 : vector<1x64xf32>
    %245 = arith.mulf %238, %222 : vector<1x64xf32>
    %246 = arith.mulf %233, %239 : vector<1x64xf32>
    %247 = arith.addf %245, %246 : vector<1x64xf32>
    %248 = math.tanh %247 : vector<1x64xf32>
    %249 = arith.mulf %244, %248 : vector<1x64xf32>
    %250 = tpu.iota {dimensions = array<i32: 1>} : vector<1x64xi32>
    %c32_i32_72 = arith.constant 32 : i32
    %251 = vector.broadcast %c32_i32_72 : i32 to vector<1x64xi32>
    %252 = arith.cmpi sge, %250, %251 : vector<1x64xi32>
    %c64_i32 = arith.constant 64 : i32
    %253 = vector.broadcast %c64_i32 : i32 to vector<1x64xi32>
    %254 = arith.cmpi slt, %250, %253 : vector<1x64xi32>
    %255 = arith.andi %252, %254 : vector<1x64xi1>
    %256 = arith.select %255, %249, %224 : vector<1x64xi1>, vector<1x64xf32>
    %257 = arith.select %255, %247, %222 : vector<1x64xi1>, vector<1x64xf32>
    %258 = vector.extract_strided_slice %256 {offsets = [0, 0], sizes = [1, 32], strides = [1, 1]} : vector<1x64xf32> to vector<1x32xf32>
    %c0_73 = arith.constant 0 : index
    %c0_74 = arith.constant 0 : index
    %259 = vector.load %arg7[%c0_73, %c0_74] : memref<2x32xf32, #tpu.memory_space<vmem>>, vector<1x32xf32>
    tpu.vector_store %arg7[%c0_73, %c0_74], %258 {strides = array<i32>} : memref<2x32xf32, #tpu.memory_space<vmem>>, vector<1x32xf32>,
    %260 = vector.extract_strided_slice %257 {offsets = [0, 0], sizes = [1, 32], strides = [1, 1]} : vector<1x64xf32> to vector<1x32xf32>
    %c0_75 = arith.constant 0 : index
    %c0_76 = arith.constant 0 : index
    %261 = vector.load %arg8[%c0_75, %c0_76] : memref<2x32xf32, #tpu.memory_space<vmem>>, vector<1x32xf32>
    tpu.vector_store %arg8[%c0_75, %c0_76], %260 {strides = array<i32>} : memref<2x32xf32, #tpu.memory_space<vmem>>, vector<1x32xf32>,
    %262 = vector.extract_strided_slice %256 {offsets = [0, 32], sizes = [1, 32], strides = [1, 1]} : vector<1x64xf32> to vector<1x32xf32>
    %c1 = arith.constant 1 : index
    %c0_77 = arith.constant 0 : index
    %263 = vector.load %arg7[%c1, %c0_77] : memref<2x32xf32, #tpu.memory_space<vmem>>, vector<1x32xf32>
    tpu.vector_store %arg7[%c1, %c0_77], %262 {strides = array<i32>} : memref<2x32xf32, #tpu.memory_space<vmem>>, vector<1x32xf32>,
    %264 = vector.extract_strided_slice %257 {offsets = [0, 32], sizes = [1, 32], strides = [1, 1]} : vector<1x64xf32> to vector<1x32xf32>
    %c1_78 = arith.constant 1 : index
    %c0_79 = arith.constant 0 : index
    %265 = vector.load %arg8[%c1_78, %c0_79] : memref<2x32xf32, #tpu.memory_space<vmem>>, vector<1x32xf32>
    tpu.vector_store %arg8[%c1_78, %c0_79], %264 {strides = array<i32>} : memref<2x32xf32, #tpu.memory_space<vmem>>, vector<1x32xf32>,
    %266 = vector.extract_strided_slice %256 {offsets = [0, 32], sizes = [1, 32], strides = [1, 1]} : vector<1x64xf32> to vector<1x32xf32>
    %c0_80 = arith.constant 0 : index
    %c0_81 = arith.constant 0 : index
    %267 = vector.load %arg4[%c0_80, %c0_81] : memref<1x32xf32, #tpu.memory_space<vmem>>, vector<1x32xf32>
    %268 = arith.mulf %266, %267 : vector<1x32xf32>
    %cst_82 = arith.constant dense<0.000000e+00> : vector<1xf32>
    %269 = vector.multi_reduction <add>, %268, %cst_82 [1] : vector<1x32xf32> to vector<1xf32>
    %270 = vector.shape_cast %269 : vector<1xf32> to vector<1x1xf32>
    %c0_83 = arith.constant 0 : index
    %c0_84 = arith.constant 0 : index
    %271 = vector.load %arg5[%c0_83, %c0_84] : memref<1x1xf32, #tpu.memory_space<vmem>>, vector<1x1xf32>
    %272 = arith.addf %270, %271 : vector<1x1xf32>
    %c0_85 = arith.constant 0 : index
    %c0_86 = arith.constant 0 : index
    %273 = vector.load %arg6[%c0_85, %c0_86] : memref<1x1xf32, #tpu.memory_space<vmem>>, vector<1x1xf32>
    tpu.vector_store %arg6[%c0_85, %c0_86], %272 {strides = array<i32>} : memref<1x1xf32, #tpu.memory_space<vmem>>, vector<1x1xf32>,
    return
  }
}

</mosaic_0001>

<llo_original>
// kernel: lstm_forward.1
$region0: #{lstm_forward.1}
  #allocation0 [shape = 'u32[]', space=smem, size = 0x4, offset = 0x4, fixed_abs, tag = 'smem constant byte address 0x4 - core index']
  #allocation1 [shape = 'u32[144,128]{1,0:T(1,128)}', space=vmem, size = 0x12000, scoped, tag = 'internal scratch']
  #allocation2 [shape = 'f32[1,1]{1,0:T(1,128)S(1)}', space=vmem, size = 0x200, scoped, tag = 'scoped memory for lstm_forward.1']
  %s0 = inlined_call_operand.vmem [shape: f32[8,32], index: 0, kind: input, shape index: {}]
  %s1 = inlined_call_operand.hbm [shape: f32[32,256], index: 1, kind: input, shape index: {}]
  %s2 = inlined_call_operand.hbm [shape: bf16[64,256], index: 2, kind: input, shape index: {}]
  %s3 = inlined_call_operand.vmem [shape: f32[1,256], index: 3, kind: input, shape index: {}]
  %s4 = inlined_call_operand.vmem [shape: f32[1,32], index: 4, kind: input, shape index: {}]
  %s5 = inlined_call_operand.<no memory space> [shape: f32[1,1], index: 5, kind: input, shape index: {}]
  %s6 = inlined_call_operand.hbm [shape: f32[1,1], index: 6, kind: output, shape index: {0}]
  %s7 = inlined_call_operand.hbm [shape: f32[2,32], index: 7, kind: output, shape index: {1}]
  %s8 = inlined_call_operand.hbm [shape: f32[2,32], index: 8, kind: output, shape index: {2}]
  %9 = xla_tuple %s6, %s7, %s8
  %s10 = sld [smem:[#allocation0]]
  $region58: #{lstm_forward.1} parent=0
    _
  %s12 = ssub.s32 1, %s10
  %s13 = scalar_select 0, %s12, %s10
  %v14 = vstv %s5
  %15 = vst [vmem:[#allocation2] sm:$0x1] %v14
  $region1: #{lstm_forward.1} parent=0
    #allocation3 [shape = 'u8[32768]{0}', space=vmem, size = 0x8000, scoped, tag = 'input window, operand 1, single buffered']
    #allocation4 [shape = 's32[1]{0}', space=sflag, size = 0x4, scoped, tag = 'scoped memory for lstm_forward.1']
    #allocation5 [shape = 's32[1]{0}', space=sflag, size = 0x4, scoped, tag = 'scoped memory for lstm_forward.1']
    #allocation6 [shape = 'u8[32768]{0}', space=vmem, size = 0x8000, scoped, tag = 'input window, operand 2, single buffered']
    #allocation7 [shape = 's32[1]{0}', space=sflag, size = 0x4, scoped, tag = 'scoped memory for lstm_forward.1']
    #allocation8 [shape = 'u8[512]{0}', space=vmem, size = 0x400, scoped, tag = 'output window, operand 0, single buffered']
    #allocation9 [shape = 'u8[1024]{0}', space=vmem, size = 0x400, scoped, tag = 'output window, operand 1, single buffered']
    #allocation10 [shape = 's32[1]{0}', space=sflag, size = 0x4, scoped, tag = 'scoped memory for lstm_forward.1']
    #allocation11 [shape = 'u8[1024]{0}', space=vmem, size = 0x400, scoped, tag = 'output window, operand 2, single buffered']
    %16 = vsyncpa [#allocation4], 0
    %17 = vsyncpa [#allocation7], 0
    %18 = vsyncpa [#allocation5], 0
    %19 = vsyncpa [#allocation10], 0
    // Predicated region
    $region2: #{lstm_forward.1} parent=1 // pred_check
      _
    $region3: #{lstm_forward.1} parent=1 // pred_check_branch
      %21 = sbr.rel (0) target = $region5
    $region4: #{lstm_forward.1} parent=1 // pred_region
      _
    $region5: #{lstm_forward.1} parent=1 // pred_fallthru
      _
    // Predicated region
    $region6: #{lstm_forward.1} parent=1 // pred_check
      _
    $region7: #{lstm_forward.1} parent=1 // pred_check_branch
      %23 = sbr.rel (0) target = $region9
    $region8: #{lstm_forward.1} parent=1 // pred_region
      %s25 = ssub.s32 1024, 1024
      %26 = vsyncadd [#allocation4], %s25
      %s27 = sshll.u32 [#allocation3], 4
      %s28 = int_to_ptr.vmem [resolvable:$true] %s27
      %33 = dma.hbm_to_vmem [thread:$0]  %s1, 1024, %s28, [#allocation4], 256, 256, 16
    $region9: #{lstm_forward.1} parent=1 // pred_fallthru
      _
    // Predicated region
    $region10: #{lstm_forward.1} parent=1 // pred_check
      _
    $region11: #{lstm_forward.1} parent=1 // pred_check_branch
      %35 = sbr.rel (0) target = $region13
    $region12: #{lstm_forward.1} parent=1 // pred_region
      %s37 = ssub.s32 1024, 1024
      %38 = vsyncadd [#allocation7], %s37
      %s39 = sshll.u32 [#allocation6], 4
      %s40 = int_to_ptr.vmem [resolvable:$true] %s39
      %45 = dma.hbm_to_vmem [thread:$0]  %s2, 1024, %s40, [#allocation7], 128, 128, 8
    $region13: #{lstm_forward.1} parent=1 // pred_fallthru
      _
    // Predicated region
    $region14: #{lstm_forward.1} parent=1 // pred_check
      _
    $region15: #{lstm_forward.1} parent=1 // pred_check_branch
      %47 = sbr.rel (0) target = $region17
    $region16: #{lstm_forward.1} parent=1 // pred_region
      _
    $region17: #{lstm_forward.1} parent=1 // pred_fallthru
      _
    // Predicated region
    $region18: #{lstm_forward.1} parent=1 // pred_check
      _
    $region19: #{lstm_forward.1} parent=1 // pred_check_branch
      %49 = sbr.rel (0) target = $region21
    $region20: #{lstm_forward.1} parent=1 // pred_region
      _
    $region21: #{lstm_forward.1} parent=1 // pred_fallthru
      _
    // Predicated region
    $region22: #{lstm_forward.1} parent=1 // pred_check
      _
    $region23: #{lstm_forward.1} parent=1 // pred_check_branch
      %51 = sbr.rel (0) target = $region25
    $region24: #{lstm_forward.1} parent=1 // pred_region
      _
    $region25: #{lstm_forward.1} parent=1 // pred_fallthru
      _
    // Predicated region
    $region26: #{lstm_forward.1} parent=1 // pred_check
      _
    $region27: #{lstm_forward.1} parent=1 // pred_check_branch
      %53 = sbr.rel (0) target = $region29
    $region28: #{lstm_forward.1} parent=1 // pred_region
      %54 = dma.done [#allocation4], 1024
    $region29: #{lstm_forward.1} parent=1 // pred_fallthru
      _
    // Predicated region
    $region30: #{lstm_forward.1} parent=1 // pred_check
      _
    $region31: #{lstm_forward.1} parent=1 // pred_check_branch
      %56 = sbr.rel (0) target = $region33
    $region32: #{lstm_forward.1} parent=1 // pred_region
      %57 = dma.done [#allocation7], 1024
    $region33: #{lstm_forward.1} parent=1 // pred_fallthru
      _
    %v59 = vld [vmem:[%s3] sm:$0x3]
    %v60 = vld [vmem:[%s0] sm:$0xff]
    %v61 = vld [vmem:[#allocation3] sm:$0xff]
    %v62 = vld [vmem:[#allocation3 + $0x8] sm:$0xff]
    %v63 = vld [vmem:[#allocation3 + $0x10] sm:$0xff]
    %v64 = vld [vmem:[#allocation3 + $0x18] sm:$0xff]
    %v65 = vld [vmem:[#allocation3 + $0x20] sm:$0xff]
    %v66 = vld [vmem:[#allocation3 + $0x28] sm:$0xff]
    %v67 = vld [vmem:[#allocation3 + $0x30] sm:$0xff]
    %v68 = vld [vmem:[#allocation3 + $0x38] sm:$0xff]
    %v70 = vlaneseq
    %v71 = vshrl.u32 %v70, 7
    %v72 = vsub.s32 0, %v71
    %v73 = vrot.slane %v59, %v72
    %v74 = vlaneseq
    %v75 = vshrl.u32 %v74, 7
    %v76 = vsub.s32 1, %v75
    %v77 = vrot.slane %v59, %v76
    %vm80 = vcmask 261120
    %v82 = vsel %vm80, %v60, 0
    %84 = vmatprep.subr.mxu0 0.0
    %85 = vmatpush1.msra.mxu0 0.0
    %86 = vmatprep.subr.mxu0 0.0
    %87 = vmatpush1.msra.mxu0 0.0
    %88 = vmatprep.subr.mxu0 0.0
    %89 = vmatpush1.msra.mxu0 0.0
    %90 = vmatprep.subr.mxu0 0.0
    %91 = vmatpush1.msra.mxu0 0.0
    %92 = vmatprep.subr.mxu0 0.0
    %93 = vmatpush1.msra.mxu0 0.0
    %94 = vmatprep.subr.mxu0 0.0
    %95 = vmatpush1.msra.mxu0 0.0
    %96 = vmatprep.subr.mxu0 0.0
    %97 = vmatpush1.msra.mxu0 0.0
    %98 = vmatprep.subr.mxu0 0.0
    %99 = vmatpush1.msra.mxu0 0.0
    %100 = vmatprep.subr.mxu0 0.0
    %101 = vmatpush1.msra.mxu0 0.0
    %102 = vmatprep.subr.mxu0 0.0
    %103 = vmatpush1.msra.mxu0 0.0
    %104 = vmatprep.subr.mxu0 0.0
    %105 = vmatpush1.msra.mxu0 0.0
    %106 = vmatprep.subr.mxu0 0.0
    %107 = vmatpush1.msra.mxu0 0.0
    %108 = vmatprep.subr.mxu0 %v68
    %109 = vmatpush1.msra.mxu0 %v67
    %110 = vmatprep.subr.mxu0 %v66
    %111 = vmatpush1.msra.mxu0 %v65
    %112 = vmatprep.subr.mxu0 %v64
    %113 = vmatpush1.msra.mxu0 %v63
    %114 = vmatprep.subr.mxu0 %v62
    %115 = vmatpush1.msra.mxu0 %v61
    %116 = vmatprep.subr.mxu0 0.0
    %117 = vmatpush2.msra.mxu0 0.0
    %118 = vmatprep.subr.mxu0 0.0
    %119 = vmatpush2.msra.mxu0 0.0
    %120 = vmatprep.subr.mxu0 0.0
    %121 = vmatpush2.msra.mxu0 0.0
    %122 = vmatprep.subr.mxu0 0.0
    %123 = vmatpush2.msra.mxu0 0.0
    %124 = vmatprep.subr.mxu0 0.0
    %125 = vmatpush2.msra.mxu0 0.0
    %126 = vmatprep.subr.mxu0 0.0
    %127 = vmatpush2.msra.mxu0 0.0
    %128 = vmatprep.subr.mxu0 0.0
    %129 = vmatpush2.msra.mxu0 0.0
    %130 = vmatprep.subr.mxu0 0.0
    %131 = vmatpush2.msra.mxu0 0.0
    %132 = vmatprep.subr.mxu0 0.0
    %133 = vmatpush2.msra.mxu0 0.0
    %134 = vmatprep.subr.mxu0 0.0
    %135 = vmatpush2.msra.mxu0 0.0
    %136 = vmatprep.subr.mxu0 0.0
    %137 = vmatpush2.msra.mxu0 0.0
    %138 = vmatprep.subr.mxu0 0.0
    %139 = vmatpush2.msra.mxu0 0.0
    %140 = vmatprep.subr.mxu0 0.0
    %141 = vmatpush2.msra.mxu0 0.0
    %142 = vmatprep.subr.mxu0 0.0
    %143 = vmatpush2.msra.mxu0 0.0
    %144 = vmatprep.subr.mxu0 0.0
    %145 = vmatpush2.msra.mxu0 0.0
    %146 = vmatprep.subr.mxu0 0.0
    %147 = vmatpush2.msra.mxu0 0.0
    %148 = vmatprep.mubr.f32.mxu0 0.0
    %149 = vmatmul.mubr.f32.gmra.mxu0 %v82
    %v150 = vpop.f32.mrf.mxu0
    %v151 = vadd.f32 %v73, %v150
    %v152 = vpop.f32.mrf.mxu0
    %v153 = vadd.f32 %v77, %v152
    %154 = vdwg.mxu0
    %v155 = vld [vmem:[#allocation6] sm:$0xff]
    %v156 = vld [vmem:[#allocation6 + $0x8] sm:$0xff]
    %v157 = vld [vmem:[#allocation6 + $0x10] sm:$0xff]
    %v158 = vld [vmem:[#allocation6 + $0x18] sm:$0xff]
    %v159 = vld [vmem:[#allocation6 + $0x20] sm:$0xff]
    %v160 = vld [vmem:[#allocation6 + $0x28] sm:$0xff]
    %v161 = vld [vmem:[#allocation6 + $0x30] sm:$0xff]
    %v162 = vld [vmem:[#allocation6 + $0x38] sm:$0xff]
    %v171 = vunpack.c.l.b16 %v155
    %v172 = vunpack.c.h.b16 %v155
    %v173 = vunpack.c.l.b16 %v156
    %v174 = vunpack.c.h.b16 %v156
    %v175 = vunpack.c.l.b16 %v157
    %v176 = vunpack.c.h.b16 %v157
    %v177 = vunpack.c.l.b16 %v158
    %v178 = vunpack.c.h.b16 %v158
    %v179 = vunpack.c.l.b16 %v159
    %v180 = vunpack.c.h.b16 %v159
    %v181 = vunpack.c.l.b16 %v160
    %v182 = vunpack.c.h.b16 %v160
    %v183 = vunpack.c.l.b16 %v161
    %v184 = vunpack.c.h.b16 %v161
    %v185 = vunpack.c.l.b16 %v162
    %v186 = vunpack.c.h.b16 %v162
    %v187 = vpack.c.b16 %v173, %v171
    %v188 = vpack.c.b16 %v174, %v172
    %v189 = vpack.c.b16 %v177, %v175
    %v190 = vpack.c.b16 %v178, %v176
    %v191 = vpack.c.b16 %v181, %v179
    %v192 = vpack.c.b16 %v182, %v180
    %v193 = vpack.c.b16 %v185, %v183
    %v194 = vpack.c.b16 %v186, %v184
    %vm203 = vcmask 523264
    %v205 = vsel %vm203, 0, 0
    %207 = vmatprep.subr.bf16.mxu0 0
    %208 = vmatpush1.bf16.msra.mxu0 0
    %209 = vmatprep.subr.bf16.mxu0 0
    %210 = vmatpush1.bf16.msra.mxu0 0
    %211 = vmatprep.subr.bf16.mxu0 0
    %212 = vmatpush1.bf16.msra.mxu0 0
    %213 = vmatprep.subr.bf16.mxu0 0
    %214 = vmatpush1.bf16.msra.mxu0 0
    %215 = vmatprep.subr.bf16.mxu0 %v194
    %216 = vmatpush1.bf16.msra.mxu0 %v193
    %217 = vmatprep.subr.bf16.mxu0 %v192
    %218 = vmatpush1.bf16.msra.mxu0 %v191
    %219 = vmatprep.subr.bf16.mxu0 %v190
    %220 = vmatpush1.bf16.msra.mxu0 %v189
    %221 = vmatprep.subr.bf16.mxu0 %v188
    %222 = vmatpush1.bf16.msra.mxu0 %v187
    %223 = vmatprep.subr.bf16.mxu0 0
    %224 = vmatpush2.bf16.msra.mxu0 0
    %225 = vmatprep.subr.bf16.mxu0 0
    %226 = vmatpush2.bf16.msra.mxu0 0
    %227 = vmatprep.subr.bf16.mxu0 0
    %228 = vmatpush2.bf16.msra.mxu0 0
    %229 = vmatprep.subr.bf16.mxu0 0
    %230 = vmatpush2.bf16.msra.mxu0 0
    %231 = vmatprep.subr.bf16.mxu0 0
    %232 = vmatpush2.bf16.msra.mxu0 0
    %233 = vmatprep.subr.bf16.mxu0 0
    %234 = vmatpush2.bf16.msra.mxu0 0
    %235 = vmatprep.subr.bf16.mxu0 0
    %236 = vmatpush2.bf16.msra.mxu0 0
    %237 = vmatprep.subr.bf16.mxu0 0
    %238 = vmatpush2.bf16.msra.mxu0 0
    %239 = vmatprep.mubr.bf16.mxu0 0
    %240 = vmatmul.mubr.bf16.gmra.mxu0 %v205
    %v241 = vpop.f32.mrf.mxu0
    %v242 = vadd.f32 0.0, %v241
    %v243 = vpop.f32.mrf.mxu0
    %v244 = vadd.f32 0.0, %v243
    %v245 = vpop.f32.mrf.mxu0
    %v246 = vpop.f32.mrf.mxu0
    %247 = vdwg.mxu0
    %v248 = vadd.f32 %v151, %v242
    %v249 = vadd.f32 %v153, %v244
    %v250 = vtanh.pop %v248
    %v251 = vtanh.pop %v249
    %v252 = vmul.f32 %v250, 0.5
    %v253 = vadd.f32 %v252, 0.5
    %v254 = vmul.f32 %v251, 0.5
    %v255 = vadd.f32 %v254, 0.5
    %v256 = vmul.f32 %v253, 0.0
    %v257 = vmul.f32 %v253, %v251
    %259 = vrot.lane.b32.xlu0 %v257, 64
    %v260 = vpop.permute.xlu0 %259
    %v262 = vadd.f32 %v256, %v260
    %v263 = vtanh.pop %v262
    %v264 = vmul.f32 %v255, %v263
    %v265 = vlaneseq
    %v266 = vand.u32 %v265, 127
    %vm267 = vcmp.ge.s32.totalorder %v266, 0
    %vm268 = vcmp.lt.s32.totalorder %v266, 32
    %vm269 = vmand %vm267, %vm268
    %271 = vrot.lane.b32.xlu0 %v264, 64
    %v272 = vpop.permute.xlu0 %271
    %v274 = vsel %vm269, %v272, 0.0
    %276 = vrot.lane.b32.xlu0 %v262, 64
    %v277 = vpop.permute.xlu0 %276
    %v279 = vsel %vm269, %v277, 0.0
    %v280 = vpack.c.bf16 %v274, %v274
    %v282 = vsel %vm203, %v280, 0
    %284 = vmatprep.subr.bf16.mxu0 0
    %285 = vmatpush1.bf16.msra.mxu0 0
    %286 = vmatprep.subr.bf16.mxu0 0
    %287 = vmatpush1.bf16.msra.mxu0 0
    %288 = vmatprep.subr.bf16.mxu0 0
    %289 = vmatpush1.bf16.msra.mxu0 0
    %290 = vmatprep.subr.bf16.mxu0 0
    %291 = vmatpush1.bf16.msra.mxu0 0
    %292 = vmatprep.subr.bf16.mxu0 %v194
    %293 = vmatpush1.bf16.msra.mxu0 %v193
    %294 = vmatprep.subr.bf16.mxu0 %v192
    %295 = vmatpush1.bf16.msra.mxu0 %v191
    %296 = vmatprep.subr.bf16.mxu0 %v190
    %297 = vmatpush1.bf16.msra.mxu0 %v189
    %298 = vmatprep.subr.bf16.mxu0 %v188
    %299 = vmatpush1.bf16.msra.mxu0 %v187
    %300 = vmatprep.subr.bf16.mxu0 0
    %301 = vmatpush2.bf16.msra.mxu0 0
    %302 = vmatprep.subr.bf16.mxu0 0
    %303 = vmatpush2.bf16.msra.mxu0 0
    %304 = vmatprep.subr.bf16.mxu0 0
    %305 = vmatpush2.bf16.msra.mxu0 0
    %306 = vmatprep.subr.bf16.mxu0 0
    %307 = vmatpush2.bf16.msra.mxu0 0
    %308 = vmatprep.subr.bf16.mxu0 0
    %309 = vmatpush2.bf16.msra.mxu0 0
    %310 = vmatprep.subr.bf16.mxu0 0
    %311 = vmatpush2.bf16.msra.mxu0 0
    %312 = vmatprep.subr.bf16.mxu0 0
    %313 = vmatpush2.bf16.msra.mxu0 0
    %314 = vmatprep.subr.bf16.mxu0 0
    %315 = vmatpush2.bf16.msra.mxu0 0
    %316 = vmatprep.mubr.bf16.mxu0 0
    %317 = vmatmul.mubr.bf16.gmra.mxu0 %v282
    %v318 = vpop.f32.mrf.mxu0
    %v319 = vadd.f32 0.0, %v318
    %v320 = vpop.f32.mrf.mxu0
    %v321 = vadd.f32 0.0, %v320
    %v322 = vpop.f32.mrf.mxu0
    %v323 = vpop.f32.mrf.mxu0
    %324 = vdwg.mxu0
    %v327 = vrot.slane %v319, 7
    %v328 = vrot.slane %v321, 7
    %v331 = vadd.f32 %v151, %v327
    %v332 = vadd.f32 %v153, %v328
    %v333 = vtanh.pop %v331
    %v334 = vtanh.pop %v332
    %v335 = vmul.f32 %v333, 0.5
    %v336 = vadd.f32 %v335, 0.5
    %v337 = vmul.f32 %v334, 0.5
    %v338 = vadd.f32 %v337, 0.5
    %v340 = vrot.slane %v279, 7
    %341 = vrot.lane.b32.xlu0 %v340, 64
    %v342 = vpop.permute.xlu0 %341
    %v344 = vmul.f32 %v336, %v342
    %v345 = vmul.f32 %v336, %v334
    %347 = vrot.lane.b32.xlu0 %v345, 64
    %v348 = vpop.permute.xlu0 %347
    %v350 = vadd.f32 %v344, %v348
    %v351 = vtanh.pop %v350
    %v352 = vmul.f32 %v338, %v351
    %v353 = vpack.c.bf16 %v352, %v352
    %v355 = vshrl.u32 %v353, 16
    %357 = vrot.lane.b32.xlu0 %v355, 64
    %v358 = vpop.permute.xlu0 %357
    %v360 = vsel %vm203, %v358, 0
    %362 = vmatprep.subr.bf16.mxu0 0
    %363 = vmatpush1.bf16.msra.mxu0 0
    %364 = vmatprep.subr.bf16.mxu0 0
    %365 = vmatpush1.bf16.msra.mxu0 0
    %366 = vmatprep.subr.bf16.mxu0 0
    %367 = vmatpush1.bf16.msra.mxu0 0
    %368 = vmatprep.subr.bf16.mxu0 0
    %369 = vmatpush1.bf16.msra.mxu0 0
    %370 = vmatprep.subr.bf16.mxu0 %v194
    %371 = vmatpush1.bf16.msra.mxu0 %v193
    %372 = vmatprep.subr.bf16.mxu0 %v192
    %373 = vmatpush1.bf16.msra.mxu0 %v191
    %374 = vmatprep.subr.bf16.mxu0 %v190
    %375 = vmatpush1.bf16.msra.mxu0 %v189
    %376 = vmatprep.subr.bf16.mxu0 %v188
    %377 = vmatpush1.bf16.msra.mxu0 %v187
    %378 = vmatprep.subr.bf16.mxu0 0
    %379 = vmatpush2.bf16.msra.mxu0 0
    %380 = vmatprep.subr.bf16.mxu0 0
    %381 = vmatpush2.bf16.msra.mxu0 0
    %382 = vmatprep.subr.bf16.mxu0 0
    %383 = vmatpush2.bf16.msra.mxu0 0
    %384 = vmatprep.subr.bf16.mxu0 0
    %385 = vmatpush2.bf16.msra.mxu0 0
    %386 = vmatprep.subr.bf16.mxu0 0
    %387 = vmatpush2.bf16.msra.mxu0 0
    %388 = vmatprep.subr.bf16.mxu0 0
    %389 = vmatpush2.bf16.msra.mxu0 0
    %390 = vmatprep.subr.bf16.mxu0 0
    %391 = vmatpush2.bf16.msra.mxu0 0
    %392 = vmatprep.subr.bf16.mxu0 0
    %393 = vmatpush2.bf16.msra.mxu0 0
    %394 = vmatprep.mubr.bf16.mxu0 0
    %395 = vmatmul.mubr.bf16.gmra.mxu0 %v360
    %v396 = vpop.f32.mrf.mxu0
    %v397 = vadd.f32 0.0, %v396
    %v398 = vpop.f32.mrf.mxu0
    %v399 = vadd.f32 0.0, %v398
    %v400 = vpop.f32.mrf.mxu0
    %v401 = vpop.f32.mrf.mxu0
    %402 = vdwg.mxu0
    %v405 = vrot.slane %v397, 6
    %v406 = vrot.slane %v399, 6
    %v409 = vadd.f32 %v151, %v405
    %v410 = vadd.f32 %v153, %v406
    %v411 = vtanh.pop %v409
    %v412 = vtanh.pop %v410
    %v413 = vmul.f32 %v411, 0.5
    %v414 = vadd.f32 %v413, 0.5
    %v415 = vmul.f32 %v412, 0.5
    %v416 = vadd.f32 %v415, 0.5
    %v418 = vrot.slane %v350, 7
    %v420 = vmul.f32 %v414, %v418
    %v421 = vmul.f32 %v414, %v412
    %423 = vrot.lane.b32.xlu0 %v421, 64
    %v424 = vpop.permute.xlu0 %423
    %v426 = vadd.f32 %v420, %v424
    %v427 = vtanh.pop %v426
    %v428 = vmul.f32 %v416, %v427
    %v429 = vpack.c.bf16 %v428, %v428
    %v431 = vrot.slane %v429, 1
    %432 = vrot.lane.b32.xlu0 %v431, 64
    %v433 = vpop.permute.xlu0 %432
    %v435 = vsel %vm203, %v433, 0
    %437 = vmatprep.subr.bf16.mxu0 0
    %438 = vmatpush1.bf16.msra.mxu0 0
    %439 = vmatprep.subr.bf16.mxu0 0
    %440 = vmatpush1.bf16.msra.mxu0 0
    %441 = vmatprep.subr.bf16.mxu0 0
    %442 = vmatpush1.bf16.msra.mxu0 0
    %443 = vmatprep.subr.bf16.mxu0 0
    %444 = vmatpush1.bf16.msra.mxu0 0
    %445 = vmatprep.subr.bf16.mxu0 %v194
    %446 = vmatpush1.bf16.msra.mxu0 %v193
    %447 = vmatprep.subr.bf16.mxu0 %v192
    %448 = vmatpush1.bf16.msra.mxu0 %v191
    %449 = vmatprep.subr.bf16.mxu0 %v190
    %450 = vmatpush1.bf16.msra.mxu0 %v189
    %451 = vmatprep.subr.bf16.mxu0 %v188
    %452 = vmatpush1.bf16.msra.mxu0 %v187
    %453 = vmatprep.subr.bf16.mxu0 0
    %454 = vmatpush2.bf16.msra.mxu0 0
    %455 = vmatprep.subr.bf16.mxu0 0
    %456 = vmatpush2.bf16.msra.mxu0 0
    %457 = vmatprep.subr.bf16.mxu0 0
    %458 = vmatpush2.bf16.msra.mxu0 0
    %459 = vmatprep.subr.bf16.mxu0 0
    %460 = vmatpush2.bf16.msra.mxu0 0
    %461 = vmatprep.subr.bf16.mxu0 0
    %462 = vmatpush2.bf16.msra.mxu0 0
    %463 = vmatprep.subr.bf16.mxu0 0
    %464 = vmatpush2.bf16.msra.mxu0 0
    %465 = vmatprep.subr.bf16.mxu0 0
    %466 = vmatpush2.bf16.msra.mxu0 0
    %467 = vmatprep.subr.bf16.mxu0 0
    %468 = vmatpush2.bf16.msra.mxu0 0
    %469 = vmatprep.mubr.bf16.mxu0 0
    %470 = vmatmul.mubr.bf16.gmra.mxu0 %v435
    %v471 = vpop.f32.mrf.mxu0
    %v472 = vadd.f32 0.0, %v471
    %v473 = vpop.f32.mrf.mxu0
    %v474 = vadd.f32 0.0, %v473
    %v475 = vpop.f32.mrf.mxu0
    %v476 = vpop.f32.mrf.mxu0
    %477 = vdwg.mxu0
    %v480 = vrot.slane %v472, 5
    %v481 = vrot.slane %v474, 5
    %v484 = vadd.f32 %v151, %v480
    %v485 = vadd.f32 %v153, %v481
    %v486 = vtanh.pop %v484
    %v487 = vtanh.pop %v485
    %v488 = vmul.f32 %v486, 0.5
    %v489 = vadd.f32 %v488, 0.5
    %v490 = vmul.f32 %v487, 0.5
    %v491 = vadd.f32 %v490, 0.5
    %v493 = vrot.slane %v426, 7
    %v495 = vmul.f32 %v489, %v493
    %v496 = vmul.f32 %v489, %v487
    %498 = vrot.lane.b32.xlu0 %v496, 64
    %v499 = vpop.permute.xlu0 %498
    %v501 = vadd.f32 %v495, %v499
    %v502 = vtanh.pop %v501
    %v503 = vmul.f32 %v491, %v502
    %v504 = vpack.c.bf16 %v503, %v503
    %v506 = vshrl.u32 %v504, 16
    %v508 = vrot.slane %v506, 1
    %509 = vrot.lane.b32.xlu0 %v508, 64
    %v510 = vpop.permute.xlu0 %509
    %v512 = vsel %vm203, %v510, 0
    %514 = vmatprep.subr.bf16.mxu0 0
    %515 = vmatpush1.bf16.msra.mxu0 0
    %516 = vmatprep.subr.bf16.mxu0 0
    %517 = vmatpush1.bf16.msra.mxu0 0
    %518 = vmatprep.subr.bf16.mxu0 0
    %519 = vmatpush1.bf16.msra.mxu0 0
    %520 = vmatprep.subr.bf16.mxu0 0
    %521 = vmatpush1.bf16.msra.mxu0 0
    %522 = vmatprep.subr.bf16.mxu0 %v194
    %523 = vmatpush1.bf16.msra.mxu0 %v193
    %524 = vmatprep.subr.bf16.mxu0 %v192
    %525 = vmatpush1.bf16.msra.mxu0 %v191
    %526 = vmatprep.subr.bf16.mxu0 %v190
    %527 = vmatpush1.bf16.msra.mxu0 %v189
    %528 = vmatprep.subr.bf16.mxu0 %v188
    %529 = vmatpush1.bf16.msra.mxu0 %v187
    %530 = vmatprep.subr.bf16.mxu0 0
    %531 = vmatpush2.bf16.msra.mxu0 0
    %532 = vmatprep.subr.bf16.mxu0 0
    %533 = vmatpush2.bf16.msra.mxu0 0
    %534 = vmatprep.subr.bf16.mxu0 0
    %535 = vmatpush2.bf16.msra.mxu0 0
    %536 = vmatprep.subr.bf16.mxu0 0
    %537 = vmatpush2.bf16.msra.mxu0 0
    %538 = vmatprep.subr.bf16.mxu0 0
    %539 = vmatpush2.bf16.msra.mxu0 0
    %540 = vmatprep.subr.bf16.mxu0 0
    %541 = vmatpush2.bf16.msra.mxu0 0
    %542 = vmatprep.subr.bf16.mxu0 0
    %543 = vmatpush2.bf16.msra.mxu0 0
    %544 = vmatprep.subr.bf16.mxu0 0
    %545 = vmatpush2.bf16.msra.mxu0 0
    %546 = vmatprep.mubr.bf16.mxu0 0
    %547 = vmatmul.mubr.bf16.gmra.mxu0 %v512
    %v548 = vpop.f32.mrf.mxu0
    %v549 = vadd.f32 0.0, %v548
    %v550 = vpop.f32.mrf.mxu0
    %v551 = vadd.f32 0.0, %v550
    %v552 = vpop.f32.mrf.mxu0
    %v553 = vpop.f32.mrf.mxu0
    %554 = vdwg.mxu0
    %v557 = vrot.slane %v549, 4
    %v558 = vrot.slane %v551, 4
    %v561 = vadd.f32 %v151, %v557
    %v562 = vadd.f32 %v153, %v558
    %v563 = vtanh.pop %v561
    %v564 = vtanh.pop %v562
    %v565 = vmul.f32 %v563, 0.5
    %v566 = vadd.f32 %v565, 0.5
    %v567 = vmul.f32 %v564, 0.5
    %v568 = vadd.f32 %v567, 0.5
    %v570 = vrot.slane %v501, 7
    %v572 = vmul.f32 %v566, %v570
    %v573 = vmul.f32 %v566, %v564
    %575 = vrot.lane.b32.xlu0 %v573, 64
    %v576 = vpop.permute.xlu0 %575
    %v578 = vadd.f32 %v572, %v576
    %v579 = vtanh.pop %v578
    %v580 = vmul.f32 %v568, %v579
    %v581 = vpack.c.bf16 %v580, %v580
    %v583 = vrot.slane %v581, 2
    %584 = vrot.lane.b32.xlu0 %v583, 64
    %v585 = vpop.permute.xlu0 %584
    %v587 = vsel %vm203, %v585, 0
    %589 = vmatprep.subr.bf16.mxu0 0
    %590 = vmatpush1.bf16.msra.mxu0 0
    %591 = vmatprep.subr.bf16.mxu0 0
    %592 = vmatpush1.bf16.msra.mxu0 0
    %593 = vmatprep.subr.bf16.mxu0 0
    %594 = vmatpush1.bf16.msra.mxu0 0
    %595 = vmatprep.subr.bf16.mxu0 0
    %596 = vmatpush1.bf16.msra.mxu0 0
    %597 = vmatprep.subr.bf16.mxu0 %v194
    %598 = vmatpush1.bf16.msra.mxu0 %v193
    %599 = vmatprep.subr.bf16.mxu0 %v192
    %600 = vmatpush1.bf16.msra.mxu0 %v191
    %601 = vmatprep.subr.bf16.mxu0 %v190
    %602 = vmatpush1.bf16.msra.mxu0 %v189
    %603 = vmatprep.subr.bf16.mxu0 %v188
    %604 = vmatpush1.bf16.msra.mxu0 %v187
    %605 = vmatprep.subr.bf16.mxu0 0
    %606 = vmatpush2.bf16.msra.mxu0 0
    %607 = vmatprep.subr.bf16.mxu0 0
    %608 = vmatpush2.bf16.msra.mxu0 0
    %609 = vmatprep.subr.bf16.mxu0 0
    %610 = vmatpush2.bf16.msra.mxu0 0
    %611 = vmatprep.subr.bf16.mxu0 0
    %612 = vmatpush2.bf16.msra.mxu0 0
    %613 = vmatprep.subr.bf16.mxu0 0
    %614 = vmatpush2.bf16.msra.mxu0 0
    %615 = vmatprep.subr.bf16.mxu0 0
    %616 = vmatpush2.bf16.msra.mxu0 0
    %617 = vmatprep.subr.bf16.mxu0 0
    %618 = vmatpush2.bf16.msra.mxu0 0
    %619 = vmatprep.subr.bf16.mxu0 0
    %620 = vmatpush2.bf16.msra.mxu0 0
    %621 = vmatprep.mubr.bf16.mxu0 0
    %622 = vmatmul.mubr.bf16.gmra.mxu0 %v587
    %v623 = vpop.f32.mrf.mxu0
    %v624 = vadd.f32 0.0, %v623
    %v625 = vpop.f32.mrf.mxu0
    %v626 = vadd.f32 0.0, %v625
    %v627 = vpop.f32.mrf.mxu0
    %v628 = vpop.f32.mrf.mxu0
    %629 = vdwg.mxu0
    %v632 = vrot.slane %v624, 3
    %v633 = vrot.slane %v626, 3
    %v636 = vadd.f32 %v151, %v632
    %v637 = vadd.f32 %v153, %v633
    %v638 = vtanh.pop %v636
    %v639 = vtanh.pop %v637
    %v640 = vmul.f32 %v638, 0.5
    %v641 = vadd.f32 %v640, 0.5
    %v642 = vmul.f32 %v639, 0.5
    %v643 = vadd.f32 %v642, 0.5
    %v645 = vrot.slane %v578, 7
    %v647 = vmul.f32 %v641, %v645
    %v648 = vmul.f32 %v641, %v639
    %650 = vrot.lane.b32.xlu0 %v648, 64
    %v651 = vpop.permute.xlu0 %650
    %v653 = vadd.f32 %v647, %v651
    %v654 = vtanh.pop %v653
    %v655 = vmul.f32 %v643, %v654
    %v656 = vpack.c.bf16 %v655, %v655
    %v658 = vshrl.u32 %v656, 16
    %v660 = vrot.slane %v658, 2
    %661 = vrot.lane.b32.xlu0 %v660, 64
    %v662 = vpop.permute.xlu0 %661
    %v664 = vsel %vm203, %v662, 0
    %666 = vmatprep.subr.bf16.mxu0 0
    %667 = vmatpush1.bf16.msra.mxu0 0
    %668 = vmatprep.subr.bf16.mxu0 0
    %669 = vmatpush1.bf16.msra.mxu0 0
    %670 = vmatprep.subr.bf16.mxu0 0
    %671 = vmatpush1.bf16.msra.mxu0 0
    %672 = vmatprep.subr.bf16.mxu0 0
    %673 = vmatpush1.bf16.msra.mxu0 0
    %674 = vmatprep.subr.bf16.mxu0 %v194
    %675 = vmatpush1.bf16.msra.mxu0 %v193
    %676 = vmatprep.subr.bf16.mxu0 %v192
    %677 = vmatpush1.bf16.msra.mxu0 %v191
    %678 = vmatprep.subr.bf16.mxu0 %v190
    %679 = vmatpush1.bf16.msra.mxu0 %v189
    %680 = vmatprep.subr.bf16.mxu0 %v188
    %681 = vmatpush1.bf16.msra.mxu0 %v187
    %682 = vmatprep.subr.bf16.mxu0 0
    %683 = vmatpush2.bf16.msra.mxu0 0
    %684 = vmatprep.subr.bf16.mxu0 0
    %685 = vmatpush2.bf16.msra.mxu0 0
    %686 = vmatprep.subr.bf16.mxu0 0
    %687 = vmatpush2.bf16.msra.mxu0 0
    %688 = vmatprep.subr.bf16.mxu0 0
    %689 = vmatpush2.bf16.msra.mxu0 0
    %690 = vmatprep.subr.bf16.mxu0 0
    %691 = vmatpush2.bf16.msra.mxu0 0
    %692 = vmatprep.subr.bf16.mxu0 0
    %693 = vmatpush2.bf16.msra.mxu0 0
    %694 = vmatprep.subr.bf16.mxu0 0
    %695 = vmatpush2.bf16.msra.mxu0 0
    %696 = vmatprep.subr.bf16.mxu0 0
    %697 = vmatpush2.bf16.msra.mxu0 0
    %698 = vmatprep.mubr.bf16.mxu0 0
    %699 = vmatmul.mubr.bf16.gmra.mxu0 %v664
    %v700 = vpop.f32.mrf.mxu0
    %v701 = vadd.f32 0.0, %v700
    %v702 = vpop.f32.mrf.mxu0
    %v703 = vadd.f32 0.0, %v702
    %v704 = vpop.f32.mrf.mxu0
    %v705 = vpop.f32.mrf.mxu0
    %706 = vdwg.mxu0
    %v709 = vrot.slane %v701, 2
    %v710 = vrot.slane %v703, 2
    %v713 = vadd.f32 %v151, %v709
    %v714 = vadd.f32 %v153, %v710
    %v715 = vtanh.pop %v713
    %v716 = vtanh.pop %v714
    %v717 = vmul.f32 %v715, 0.5
    %v718 = vadd.f32 %v717, 0.5
    %v719 = vmul.f32 %v716, 0.5
    %v720 = vadd.f32 %v719, 0.5
    %v722 = vrot.slane %v653, 7
    %v724 = vmul.f32 %v718, %v722
    %v725 = vmul.f32 %v718, %v716
    %727 = vrot.lane.b32.xlu0 %v725, 64
    %v728 = vpop.permute.xlu0 %727
    %v730 = vadd.f32 %v724, %v728
    %v731 = vtanh.pop %v730
    %v732 = vmul.f32 %v720, %v731
    %v733 = vpack.c.bf16 %v732, %v732
    %v735 = vrot.slane %v733, 3
    %736 = vrot.lane.b32.xlu0 %v735, 64
    %v737 = vpop.permute.xlu0 %736
    %v739 = vsel %vm203, %v737, 0
    %741 = vmatprep.subr.bf16.mxu0 0
    %742 = vmatpush1.bf16.msra.mxu0 0
    %743 = vmatprep.subr.bf16.mxu0 0
    %744 = vmatpush1.bf16.msra.mxu0 0
    %745 = vmatprep.subr.bf16.mxu0 0
    %746 = vmatpush1.bf16.msra.mxu0 0
    %747 = vmatprep.subr.bf16.mxu0 0
    %748 = vmatpush1.bf16.msra.mxu0 0
    %749 = vmatprep.subr.bf16.mxu0 %v194
    %750 = vmatpush1.bf16.msra.mxu0 %v193
    %751 = vmatprep.subr.bf16.mxu0 %v192
    %752 = vmatpush1.bf16.msra.mxu0 %v191
    %753 = vmatprep.subr.bf16.mxu0 %v190
    %754 = vmatpush1.bf16.msra.mxu0 %v189
    %755 = vmatprep.subr.bf16.mxu0 %v188
    %756 = vmatpush1.bf16.msra.mxu0 %v187
    %757 = vmatprep.subr.bf16.mxu0 0
    %758 = vmatpush2.bf16.msra.mxu0 0
    %759 = vmatprep.subr.bf16.mxu0 0
    %760 = vmatpush2.bf16.msra.mxu0 0
    %761 = vmatprep.subr.bf16.mxu0 0
    %762 = vmatpush2.bf16.msra.mxu0 0
    %763 = vmatprep.subr.bf16.mxu0 0
    %764 = vmatpush2.bf16.msra.mxu0 0
    %765 = vmatprep.subr.bf16.mxu0 0
    %766 = vmatpush2.bf16.msra.mxu0 0
    %767 = vmatprep.subr.bf16.mxu0 0
    %768 = vmatpush2.bf16.msra.mxu0 0
    %769 = vmatprep.subr.bf16.mxu0 0
    %770 = vmatpush2.bf16.msra.mxu0 0
    %771 = vmatprep.subr.bf16.mxu0 0
    %772 = vmatpush2.bf16.msra.mxu0 0
    %773 = vmatprep.mubr.bf16.mxu0 0
    %774 = vmatmul.mubr.bf16.gmra.mxu0 %v739
    %v775 = vpop.f32.mrf.mxu0
    %v776 = vadd.f32 0.0, %v775
    %v777 = vpop.f32.mrf.mxu0
    %v778 = vadd.f32 0.0, %v777
    %v779 = vpop.f32.mrf.mxu0
    %v780 = vpop.f32.mrf.mxu0
    %781 = vdwg.mxu0
    %v784 = vrot.slane %v776, 1
    %v785 = vrot.slane %v778, 1
    %v788 = vadd.f32 %v151, %v784
    %v789 = vadd.f32 %v153, %v785
    %v790 = vtanh.pop %v788
    %v791 = vtanh.pop %v789
    %v792 = vmul.f32 %v790, 0.5
    %v793 = vadd.f32 %v792, 0.5
    %v794 = vmul.f32 %v791, 0.5
    %v795 = vadd.f32 %v794, 0.5
    %v797 = vrot.slane %v730, 7
    %v799 = vmul.f32 %v793, %v797
    %v800 = vmul.f32 %v793, %v791
    %802 = vrot.lane.b32.xlu0 %v800, 64
    %v803 = vpop.permute.xlu0 %802
    %v805 = vadd.f32 %v799, %v803
    %v806 = vtanh.pop %v805
    %v807 = vmul.f32 %v795, %v806
    %v808 = vpack.c.bf16 %v807, %v807
    %v810 = vshrl.u32 %v808, 16
    %v812 = vrot.slane %v810, 3
    %813 = vrot.lane.b32.xlu0 %v812, 64
    %v814 = vpop.permute.xlu0 %813
    %v816 = vsel %vm203, %v814, 0
    %818 = vmatprep.subr.bf16.mxu0 0
    %819 = vmatpush1.bf16.msra.mxu0 0
    %820 = vmatprep.subr.bf16.mxu0 0
    %821 = vmatpush1.bf16.msra.mxu0 0
    %822 = vmatprep.subr.bf16.mxu0 0
    %823 = vmatpush1.bf16.msra.mxu0 0
    %824 = vmatprep.subr.bf16.mxu0 0
    %825 = vmatpush1.bf16.msra.mxu0 0
    %826 = vmatprep.subr.bf16.mxu0 %v194
    %827 = vmatpush1.bf16.msra.mxu0 %v193
    %828 = vmatprep.subr.bf16.mxu0 %v192
    %829 = vmatpush1.bf16.msra.mxu0 %v191
    %830 = vmatprep.subr.bf16.mxu0 %v190
    %831 = vmatpush1.bf16.msra.mxu0 %v189
    %832 = vmatprep.subr.bf16.mxu0 %v188
    %833 = vmatpush1.bf16.msra.mxu0 %v187
    %834 = vmatprep.subr.bf16.mxu0 0
    %835 = vmatpush2.bf16.msra.mxu0 0
    %836 = vmatprep.subr.bf16.mxu0 0
    %837 = vmatpush2.bf16.msra.mxu0 0
    %838 = vmatprep.subr.bf16.mxu0 0
    %839 = vmatpush2.bf16.msra.mxu0 0
    %840 = vmatprep.subr.bf16.mxu0 0
    %841 = vmatpush2.bf16.msra.mxu0 0
    %842 = vmatprep.subr.bf16.mxu0 0
    %843 = vmatpush2.bf16.msra.mxu0 0
    %844 = vmatprep.subr.bf16.mxu0 0
    %845 = vmatpush2.bf16.msra.mxu0 0
    %846 = vmatprep.subr.bf16.mxu0 0
    %847 = vmatpush2.bf16.msra.mxu0 0
    %848 = vmatprep.subr.bf16.mxu0 0
    %849 = vmatpush2.bf16.msra.mxu0 0
    %850 = vmatprep.mubr.bf16.mxu0 0
    %851 = vmatmul.mubr.bf16.gmra.mxu0 %v816
    %v852 = vpop.f32.mrf.mxu0
    %v853 = vadd.f32 0.0, %v852
    %v854 = vpop.f32.mrf.mxu0
    %v855 = vadd.f32 0.0, %v854
    %v856 = vpop.f32.mrf.mxu0
    %v857 = vpop.f32.mrf.mxu0
    %858 = vdwg.mxu0
    %v861 = vcombine.low %v853, %v855
    %v863 = vunpack.c.l.s4 1966171168
    %v864 = vunpack.c.0.s8 %v863
    %v865 = vlaneseq
    %v866 = vshrl.u32 %v865, 7
    %v867 = vsub.s32 %v864, %v866
    %v868 = vrot.slane %v861, %v867
    %v870 = vunpack.c.l.s4 1966171168
    %v871 = vunpack.c.0.s8 %v870
    %v872 = vlaneseq
    %v873 = vshrl.u32 %v872, 7
    %v874 = vsub.s32 %v871, %v873
    %v875 = vrot.slane %v868, %v874
    %v877 = vadd.f32 %v59, %v875
    %v878 = vtanh.pop %v877
    %v879 = vmul.f32 %v878, 0.5
    %v880 = vadd.f32 %v879, 0.5
    %882 = vrot.lane.b32.xlu0 %v878, 64
    %v883 = vpop.permute.xlu0 %882
    %v884 = vrot.slane %v883, 1
    %v886 = vmul.f32 %v884, 0.5
    %v887 = vadd.f32 %v886, 0.5
    %v889 = vcombine.high %v805, %v805
    %v891 = vunpack.c.l.s4 1966171168
    %v892 = vunpack.c.0.s8 %v891
    %v893 = vlaneseq
    %v894 = vshrl.u32 %v893, 7
    %v895 = vsub.s32 %v892, %v894
    %v896 = vrot.slane %v889, %v895
    %v897 = vcombine.high %v896, %v896
    %v899 = vunpack.c.l.s4 1966171168
    %v900 = vunpack.c.0.s8 %v899
    %v901 = vlaneseq
    %v902 = vshrl.u32 %v901, 7
    %v903 = vsub.s32 %v900, %v902
    %v904 = vrot.slane %v897, %v903
    %v905 = vcombine.high %v904, %v904
    %v907 = vmul.f32 %v880, %v905
    %v908 = vrot.slane %v878, 1
    %v910 = vmul.f32 %v880, %v908
    %912 = vrot.lane.b32.xlu0 %v910, 64
    %v913 = vpop.permute.xlu0 %912
    %v915 = vadd.f32 %v907, %v913
    %v916 = vtanh.pop %v915
    %918 = vrot.lane.b32.xlu0 %v916, 64
    %v919 = vpop.permute.xlu0 %918
    %v921 = vmul.f32 %v887, %v919
    %vm922 = vcmp.ge.s32.totalorder %v266, 32
    %vm923 = vcmp.lt.s32.totalorder %v266, 64
    %vm924 = vmand %vm922, %vm923
    %v926 = vrot.slane %v807, 7
    %927 = vrot.lane.b32.xlu0 %v926, 64
    %v928 = vpop.permute.xlu0 %927
    %v930 = vsel %vm924, %v921, %v928
    %v932 = vlaneseq
    %v933 = vshrl.u32 %v932, 7
    %v934 = vsub.s32 0, %v933
    %v935 = vrot.slane %v915, %v934
    %936 = vrot.lane.b32.xlu0 %v935, 64
    %v937 = vpop.permute.xlu0 %936
    %v939 = vrot.slane %v805, 7
    %940 = vrot.lane.b32.xlu0 %v939, 64
    %v941 = vpop.permute.xlu0 %940
    %v943 = vsel %vm924, %v937, %v941
    %vm944 = vcmask 253952
    %945 = vst.msk [vmem:[#allocation9] sm:$0x1] %vm944, %v930
    %946 = vst.msk [vmem:[#allocation11] sm:$0x1] %vm944, %v943
    %948 = vrot.lane.b32.xlu0 %v930, 96
    %v949 = vpop.permute.xlu0 %948
    %951 = vst.msk [vmem:[#allocation9 + $0x1] sm:$0x1] %vm944, %v949
    %953 = vrot.lane.b32.xlu0 %v943, 96
    %v954 = vpop.permute.xlu0 %953
    %956 = vst.msk [vmem:[#allocation11 + $0x1] sm:$0x1] %vm944, %v954
    %v957 = vld [vmem:[%s4] sm:$0x1]
    %v959 = vlaneseq
    %v960 = vshrl.u32 %v959, 7
    %v961 = vsub.s32 0, %v960
    %v962 = vrot.slane %v957, %v961
    %963 = vrot.lane.b32.xlu0 %v962, 32
    %v964 = vpop.permute.xlu0 %963
    %v966 = vmul.f32 %v930, %v964
    %968 = vrot.lane.b32.xlu0 %v966, 96
    %v969 = vpop.permute.xlu0 %968
    %v971 = vsel %vm944, %v969, 0.0
    %972 = vadd.xlane.f32.xlu0 %v971
    %v973 = vpop.xlane.xlu0 %972
    %v974 = vld [vmem:[#allocation2] sm:$0x1]
    %v975 = vadd.f32 %v973, %v974
    %vm976 = vcmask 0
    %977 = vst.msk [vmem:[#allocation8] sm:$0x1] %vm976, %v975
    // Predicated region
    $region34: #{lstm_forward.1} parent=1 // pred_check
      _
    $region35: #{lstm_forward.1} parent=1 // pred_check_branch
      %979 = sbr.rel (0) target = $region37
    $region36: #{lstm_forward.1} parent=1 // pred_region
      %s981 = ssub.s32 16, 16
      %982 = vsyncadd [#allocation5], %s981
      %s984 = sshll.u32 [#allocation8], 4
      %s985 = int_to_ptr.vmem [resolvable:$true] %s984
      %987 = dma.vmem_to_hbm [thread:$0]  %s985, 16, %s6, [#allocation5]
    $region37: #{lstm_forward.1} parent=1 // pred_fallthru
      _
    // Predicated region
    $region38: #{lstm_forward.1} parent=1 // pred_check
      _
    $region39: #{lstm_forward.1} parent=1 // pred_check_branch
      %989 = sbr.rel (0) target = $region41
    $region40: #{lstm_forward.1} parent=1 // pred_region
      %s991 = ssub.s32 32, 32
      %992 = vsyncadd [#allocation10], %s991
      %s994 = sshll.u32 [#allocation9], 4
      %s995 = int_to_ptr.vmem [resolvable:$true] %s994
      %997 = dma.vmem_to_hbm [thread:$0]  %s995, 32, %s7, [#allocation10]
    $region41: #{lstm_forward.1} parent=1 // pred_fallthru
      _
    // Predicated region
    $region42: #{lstm_forward.1} parent=1 // pred_check
      _
    $region43: #{lstm_forward.1} parent=1 // pred_check_branch
      %999 = sbr.rel (0) target = $region45
    $region44: #{lstm_forward.1} parent=1 // pred_region
      %s1001 = ssub.s32 32, 32
      %1002 = vsyncadd [#allocation10], %s1001
      %s1004 = sshll.u32 [#allocation11], 4
      %s1005 = int_to_ptr.vmem [resolvable:$true] %s1004
      %1007 = dma.vmem_to_hbm [thread:$0]  %s1005, 32, %s8, [#allocation10]
    $region45: #{lstm_forward.1} parent=1 // pred_fallthru
      _
    // Predicated region
    $region46: #{lstm_forward.1} parent=1 // pred_check
      _
    $region47: #{lstm_forward.1} parent=1 // pred_check_branch
      %1009 = sbr.rel (0) target = $region49
    $region48: #{lstm_forward.1} parent=1 // pred_region
      %1010 = dma.done [#allocation5], 16
    $region49: #{lstm_forward.1} parent=1 // pred_fallthru
      _
    // Predicated region
    $region50: #{lstm_forward.1} parent=1 // pred_check
      _
    $region51: #{lstm_forward.1} parent=1 // pred_check_branch
      %1012 = sbr.rel (0) target = $region53
    $region52: #{lstm_forward.1} parent=1 // pred_region
      %1013 = dma.done [#allocation10], 32
    $region53: #{lstm_forward.1} parent=1 // pred_fallthru
      _
    // Predicated region
    $region54: #{lstm_forward.1} parent=1 // pred_check
      _
    $region55: #{lstm_forward.1} parent=1 // pred_check_branch
      %1015 = sbr.rel (0) target = $region57
    $region56: #{lstm_forward.1} parent=1 // pred_region
      %1016 = dma.done [#allocation10], 32
    $region57: #{lstm_forward.1} parent=1 // pred_fallthru
      _
    %1017 = vsyncpa [#allocation4], 1
    %1018 = vsyncpa [#allocation7], 1
    %1019 = vsyncpa [#allocation5], 1
    %1020 = vsyncpa [#allocation10], 1

</llo_original>
